<compile_context>
chip_gen: v6e
topology: v6e:2x2x1
jax: 0.10.0
libtpu: 0.0.40
codegen_flags: <defaults>
</compile_context>

<pallas_src>
import functools
import math

import jax
import jax.numpy as jnp
from jax.experimental import pallas as pl
from jax.experimental.pallas import tpu as pltpu


def _mha_kernel(q_ref, k_ref, v_ref,
                wq_ref, bq_ref, wk_ref, bk_ref, wv_ref, bv_ref,
                wo_ref, bo_ref, out_ref,
                *, h, d_k, d_v, tb, nq, nk, d_model, d_model_pad):
    # Flatten the batch tile: (tb, n, d_model) -> (tb*n, d_model).  Pure
    # leading-dim merge (nq/nk are multiples of 8, asserted in the wrapper).
    q_in = q_ref[...].reshape(tb * nq, d_model)
    k_in = k_ref[...].reshape(tb * nk, d_model)
    v_in = v_ref[...].reshape(tb * nk, d_model)

    # All-heads projections: wide-N bf16 MXU matmuls, f32 accumulation + bias.
    # The 1/sqrt(d_k) scale is pre-folded into wq/bq in the wrapper.
    q = jnp.dot(q_in, wq_ref[...], preferred_element_type=jnp.float32) + bq_ref[...]
    k = jnp.dot(k_in, wk_ref[...], preferred_element_type=jnp.float32) + bk_ref[...]
    v = jnp.dot(v_in, wv_ref[...], preferred_element_type=jnp.float32) + bv_ref[...]

    # Per-head attention; h is a small compile-time constant -> static unroll.
    # Head slices are static lane sub-ranges of the lane-dense projection slabs.
    # TODO(synk): add flash-style nk tiling with an online softmax before using
    # this kernel with very long key sequences.
    o_heads = []
    for hi in range(h):
        qh = q[:, hi * d_k:(hi + 1) * d_k].reshape(tb, nq, d_k).astype(jnp.bfloat16)
        kh = k[:, hi * d_k:(hi + 1) * d_k].reshape(tb, nk, d_k).astype(jnp.bfloat16)
        vh = v[:, hi * d_v:(hi + 1) * d_v].reshape(tb, nk, d_v).astype(jnp.bfloat16)

        # Scores: contract last dims directly (no explicit K transpose).
        att = jnp.einsum('bqd,bkd->bqk', qh, kh,
                         preferred_element_type=jnp.float32)

        # Softmax over keys; elementwise math stays in f32.
        att = att - jnp.max(att, axis=-1, keepdims=True)
        p = jnp.exp(att)
        p = p * pl.reciprocal(jnp.sum(p, axis=-1, keepdims=True), approx=True)
        # TODO(synk): attention_mask / attention_weights / train-mode dropout
        # from the PyTorch module are not implemented (eval-mode forward only).

        o = jnp.einsum('bqk,bkv->bqv', p.astype(jnp.bfloat16), vh,
                       preferred_element_type=jnp.float32)       # (tb, nq, d_v)
        o_heads.append(o.reshape(tb * nq, d_v))

    # Head concat along lanes, then ONE output projection with K = h*d_v.
    o_cat = jnp.concatenate(o_heads, axis=-1).astype(jnp.bfloat16)
    out = jnp.dot(o_cat, wo_ref[...], preferred_element_type=jnp.float32) + bo_ref[...]
    out_ref[...] = out.reshape(tb, nq, d_model_pad).astype(out_ref.dtype)


def _round_up(x, m):
    return (x + m - 1) // m * m


def _vmem_bytes_estimate(tb, nq, nk, d_model, d_model_pad, h, d_k, d_v, out_bytes):
    """Rough per-grid-step VMEM footprint (bytes)."""
    act = 2 * (tb * nq * d_model + 2 * tb * nk * d_model) * 2     # dbl-buf bf16 q/k/v tiles
    outb = 2 * tb * nq * d_model_pad * out_bytes                  # dbl-buf output tile
    wts = 2 * (2 * d_model * h * d_k + d_model * h * d_v
               + h * d_v * d_model_pad) * 2                       # resident bf16 weights
    proj = (tb * nq * h * d_k + tb * nk * h * d_k + tb * nk * h * d_v) * 4   # f32 q/k/v slabs
    scores = 2 * tb * nq * nk * 4                                 # per-head score + exp
    ocat = tb * nq * (h * d_v + d_model_pad) * 4                  # concat + out-proj temporaries
    return act + outb + wts + proj + scores + ocat


def scaled_dot_product_attention(queries, keys, values, params, *, h, d_k, d_v,
                                 block_b=None,
                                 vmem_budget_bytes=48 * 1024 * 1024):
    b_s, nq, d_model = queries.shape
    nk = keys.shape[1]
    wq, bq, wk, bk, wv, bv, wo, bo = params

    # (8,128) layout guards: keep the (tb, n, d_model) <-> (tb*n, d_model)
    # reshapes free leading-dim merges.
    # TODO(synk): pad nq (free) / nk (needs softmax masking) for ragged lengths.
    assert nq % 8 == 0 and nk % 8 == 0, "nq and nk must be multiples of 8"

    d_model_pad = _round_up(d_model, 128)          # lane-dense output stores
    out_bytes = jnp.dtype(queries.dtype).itemsize

    # --- batch tile selection -------------------------------------------------
    if block_b is None:
        divisors = sorted((d for d in range(1, b_s + 1) if b_s % d == 0),
                          reverse=True)
        block_b = 1
        # Prefer >= 2 grid points along the batch axis (v7x has 2 TensorCores),
        # then take the largest tile whose estimated footprint fits the budget.
        for want_multi in (True, False):
            found = False
            for tb_c in divisors:
                nb_c = b_s // tb_c
                if want_multi and b_s >= 2 and nb_c < 2:
                    continue
                if _vmem_bytes_estimate(tb_c, nq, nk, d_model, d_model_pad,
                                        h, d_k, d_v, out_bytes) <= vmem_budget_bytes:
                    block_b = tb_c
                    found = True
                    break
            if found:
                break
    tb = block_b
    assert b_s % tb == 0, "batch must be divisible by the batch tile"
    nb = b_s // tb

    est = _vmem_bytes_estimate(tb, nq, nk, d_model, d_model_pad,
                               h, d_k, d_v, out_bytes)
    vmem_limit = int(min(100 * 1024 * 1024, max(32 * 1024 * 1024, 2 * est)))

    # --- one-time parameter prep (wrapper-side layout plumbing) ---------------
    scale = 1.0 / math.sqrt(d_k)
    wq2 = (wq * scale).astype(jnp.bfloat16)                  # scale folded into Wq
    bq2 = (bq * scale).reshape(1, h * d_k).astype(jnp.float32)
    wk2 = wk.astype(jnp.bfloat16)
    bk2 = bk.reshape(1, h * d_k).astype(jnp.float32)
    wv2 = wv.astype(jnp.bfloat16)
    bv2 = bv.reshape(1, h * d_v).astype(jnp.float32)
    wo2 = wo.astype(jnp.bfloat16)
    bo2 = bo.reshape(1, d_model).astype(jnp.float32)
    if d_model_pad != d_model:
        wo2 = jnp.pad(wo2, ((0, 0), (0, d_model_pad - d_model)))
        bo2 = jnp.pad(bo2, ((0, 0), (0, d_model_pad - d_model)))

    # bf16 activations from the wrapper: halves activation HBM traffic and
    # removes per-step in-kernel casts.
    q_bf = queries.astype(jnp.bfloat16)
    k_bf = keys.astype(jnp.bfloat16)
    v_bf = values.astype(jnp.bfloat16)

    kernel = functools.partial(_mha_kernel, h=h, d_k=d_k, d_v=d_v,
                               tb=tb, nq=nq, nk=nk,
                               d_model=d_model, d_model_pad=d_model_pad)

    in_specs = [
        pl.BlockSpec((tb, nq, d_model), lambda bi: (bi, 0, 0)),       # queries
        pl.BlockSpec((tb, nk, d_model), lambda bi: (bi, 0, 0)),       # keys
        pl.BlockSpec((tb, nk, d_model), lambda bi: (bi, 0, 0)),       # values
        pl.BlockSpec((d_model, h * d_k), lambda bi: (0, 0)),          # wq (resident)
        pl.BlockSpec((1, h * d_k), lambda bi: (0, 0)),                # bq
        pl.BlockSpec((d_model, h * d_k), lambda bi: (0, 0)),          # wk
        pl.BlockSpec((1, h * d_k), lambda bi: (0, 0)),                # bk
        pl.BlockSpec((d_model, h * d_v), lambda bi: (0, 0)),          # wv
        pl.BlockSpec((1, h * d_v), lambda bi: (0, 0)),                # bv
        pl.BlockSpec((h * d_v, d_model_pad), lambda bi: (0, 0)),      # wo (resident)
        pl.BlockSpec((1, d_model_pad), lambda bi: (0, 0)),            # bo
    ]
    out_specs = pl.BlockSpec((tb, nq, d_model_pad), lambda bi: (bi, 0, 0))

    out_padded = pl.pallas_call(
        kernel,
        out_shape=jax.ShapeDtypeStruct((b_s, nq, d_model_pad), queries.dtype),
        grid=(nb,),
        in_specs=in_specs,
        out_specs=out_specs,
        compiler_params=pltpu.CompilerParams(
            dimension_semantics=("parallel",),
            vmem_limit_bytes=vmem_limit),
    )(q_bf, k_bf, v_bf, wq2, bq2, wk2, bk2, wv2, bv2, wo2, bo2)

    if d_model_pad != d_model:
        out_padded = out_padded[..., :d_model]
    return out_padded


def init_params(key, d_model, d_k, d_v, h, std=0.001, bias_std=0.0):
    """PyTorch init_weights: Linear weights ~ N(0, std), biases = 0 by default.
    Weights stored as (in_features, out_features) (pre-transposed)."""
    k1, k2, k3, k4, k5, k6, k7, k8 = jax.random.split(key, 8)
    wq = std * jax.random.normal(k1, (d_model, h * d_k), jnp.float32)
    wk = std * jax.random.normal(k2, (d_model, h * d_k), jnp.float32)
    wv = std * jax.random.normal(k3, (d_model, h * d_v), jnp.float32)
    wo = std * jax.random.normal(k4, (h * d_v, d_model), jnp.float32)
    bq = bias_std * jax.random.normal(k5, (1, h * d_k), jnp.float32)
    bk = bias_std * jax.random.normal(k6, (1, h * d_k), jnp.float32)
    bv = bias_std * jax.random.normal(k7, (1, h * d_v), jnp.float32)
    bo = bias_std * jax.random.normal(k8, (1, d_model), jnp.float32)
    return (wq, bq, wk, bk, wv, bv, wo, bo)


def reference_attention(queries, keys, values, params, *, h, d_k, d_v):
    """Pure-JAX f32 reference mirroring the PyTorch forward (eval mode)."""
    wq, bq, wk, bk, wv, bv, wo, bo = params
    b_s, nq, _ = queries.shape
    nk = keys.shape[1]
    q = (queries @ wq + bq).reshape(b_s, nq, h, d_k).transpose(0, 2, 1, 3)
    k = (keys @ wk + bk).reshape(b_s, nk, h, d_k).transpose(0, 2, 3, 1)
    v = (values @ wv + bv).reshape(b_s, nk, h, d_v).transpose(0, 2, 1, 3)
    att = jnp.matmul(q, k) / jnp.sqrt(jnp.float32(d_k))
    att = jax.nn.softmax(att, axis=-1)
    out = jnp.matmul(att, v).transpose(0, 2, 1, 3).reshape(b_s, nq, h * d_v)
    return out @ wo + bo


if __name__ == "__main__":
    # Small shapes consistent with the module's forward signature.
    b_s, nq, nk = 2, 16, 16
    d_model, d_k, d_v, h = 64, 16, 16, 4

    key = jax.random.PRNGKey(0)
    kq, kk, kv, kp, kp2 = jax.random.split(key, 5)
    queries = jax.random.normal(kq, (b_s, nq, d_model), jnp.float32)
    keys = jax.random.normal(kk, (b_s, nk, d_model), jnp.float32)
    values = jax.random.normal(kv, (b_s, nk, d_model), jnp.float32)

    # 1) Module-faithful init (weights ~ N(0, 0.001), biases = 0).
    params = init_params(kp, d_model, d_k, d_v, h)
    out = scaled_dot_product_attention(queries, keys, values, params,
                                       h=h, d_k=d_k, d_v=d_v)
    out = jax.block_until_ready(out)
    ref = reference_attention(queries, keys, values, params, h=h, d_k=d_k, d_v=d_v)
    assert out.shape == (b_s, nq, d_model)
    rel_err = float(jnp.max(jnp.abs(out - ref))) / (float(jnp.max(jnp.abs(ref))) + 1e-12)
    assert rel_err < 2e-2, rel_err

    # 2) Realistic-scale weights/biases so bf16 + approx-reciprocal error is
    #    actually exercised (the std=0.001 init makes outputs ~1e-6).
    params_big = init_params(kp2, d_model, d_k, d_v, h, std=0.05, bias_std=0.05)
    out2 = scaled_dot_product_attention(queries, keys, values, params_big,
                                        h=h, d_k=d_k, d_v=d_v)
    out2 = jax.block_until_ready(out2)
    ref2 = reference_attention(queries, keys, values, params_big,
                               h=h, d_k=d_k, d_v=d_v)
    rel_err2 = float(jnp.max(jnp.abs(out2 - ref2))) / (float(jnp.max(jnp.abs(ref2))) + 1e-12)
    assert rel_err2 < 2e-2, rel_err2

    print("KERNEL_OK")
</pallas_src>

<mosaic_0001>
module attributes {stable_mosaic.version = 11 : i64} {
  func.func @_mha_kernel(%arg0: i32, %arg1: memref<1x16x64xbf16, #tpu.memory_space<vmem>>, %arg2: memref<1x16x64xbf16, #tpu.memory_space<vmem>>, %arg3: memref<1x16x64xbf16, #tpu.memory_space<vmem>>, %arg4: memref<64x64xbf16, #tpu.memory_space<vmem>>, %arg5: memref<1x64xf32, #tpu.memory_space<vmem>>, %arg6: memref<64x64xbf16, #tpu.memory_space<vmem>>, %arg7: memref<1x64xf32, #tpu.memory_space<vmem>>, %arg8: memref<64x64xbf16, #tpu.memory_space<vmem>>, %arg9: memref<1x64xf32, #tpu.memory_space<vmem>>, %arg10: memref<64x128xbf16, #tpu.memory_space<vmem>>, %arg11: memref<1x128xf32, #tpu.memory_space<vmem>>, %arg12: memref<1x16x128xf32, #tpu.memory_space<vmem>>) attributes {dimension_semantics = [#tpu.dimension_semantics<parallel>], iteration_bounds = array<i64: 2>, scalar_prefetch = 0 : i64, scratch_operands = 0 : i64, tpu.core_type = #tpu.core_type<tc>, window_params = [{transform_indices = @transform_0, window_bounds = array<i64: 1, 16, 64>}, {transform_indices = @transform_1, window_bounds = array<i64: 1, 16, 64>}, {transform_indices = @transform_2, window_bounds = array<i64: 1, 16, 64>}, {pipeline_mode = #tpu.pipeline_mode<synchronous>, transform_indices = @transform_3, window_bounds = array<i64: 64, 64>}, {pipeline_mode = #tpu.pipeline_mode<synchronous>, transform_indices = @transform_4, window_bounds = array<i64: 1, 64>}, {pipeline_mode = #tpu.pipeline_mode<synchronous>, transform_indices = @transform_5, window_bounds = array<i64: 64, 64>}, {pipeline_mode = #tpu.pipeline_mode<synchronous>, transform_indices = @transform_6, window_bounds = array<i64: 1, 64>}, {pipeline_mode = #tpu.pipeline_mode<synchronous>, transform_indices = @transform_7, window_bounds = array<i64: 64, 64>}, {pipeline_mode = #tpu.pipeline_mode<synchronous>, transform_indices = @transform_8, window_bounds = array<i64: 1, 64>}, {pipeline_mode = #tpu.pipeline_mode<synchronous>, transform_indices = @transform_9, window_bounds = array<i64: 64, 128>}, {pipeline_mode = #tpu.pipeline_mode<synchronous>, transform_indices = @transform_10, window_bounds = array<i64: 1, 128>}, {transform_indices = @transform_11, window_bounds = array<i64: 1, 16, 128>}]} {
    %c0 = arith.constant 0 : index
    %c0_0 = arith.constant 0 : index
    %c0_1 = arith.constant 0 : index
    %0 = vector.load %arg1[%c0, %c0_0, %c0_1] : memref<1x16x64xbf16, #tpu.memory_space<vmem>>, vector<1x16x64xbf16>
    %1 = vector.shape_cast %0 : vector<1x16x64xbf16> to vector<16x64xbf16>
    %c0_2 = arith.constant 0 : index
    %c0_3 = arith.constant 0 : index
    %c0_4 = arith.constant 0 : index
    %2 = vector.load %arg2[%c0_2, %c0_3, %c0_4] : memref<1x16x64xbf16, #tpu.memory_space<vmem>>, vector<1x16x64xbf16>
    %3 = vector.shape_cast %2 : vector<1x16x64xbf16> to vector<16x64xbf16>
    %c0_5 = arith.constant 0 : index
    %c0_6 = arith.constant 0 : index
    %c0_7 = arith.constant 0 : index
    %4 = vector.load %arg3[%c0_5, %c0_6, %c0_7] : memref<1x16x64xbf16, #tpu.memory_space<vmem>>, vector<1x16x64xbf16>
    %5 = vector.shape_cast %4 : vector<1x16x64xbf16> to vector<16x64xbf16>
    %c0_8 = arith.constant 0 : index
    %c0_9 = arith.constant 0 : index
    %6 = vector.load %arg4[%c0_8, %c0_9] : memref<64x64xbf16, #tpu.memory_space<vmem>>, vector<64x64xbf16>
    %cst = arith.constant dense<0.000000e+00> : vector<16x64xf32>
    %7 = tpu.matmul %1, %6, %cst {dimension_numbers = #tpu.dot_dimension_numbers<[1], [0], [0], [1], [0, 0, 1, 1], [], []>} : vector<16x64xbf16>, vector<64x64xbf16>, vector<16x64xf32> -> vector<16x64xf32>
    %c0_10 = arith.constant 0 : index
    %c0_11 = arith.constant 0 : index
    %8 = vector.load %arg5[%c0_10, %c0_11] : memref<1x64xf32, #tpu.memory_space<vmem>>, vector<1x64xf32>
    %9 = vector.broadcast %8 : vector<1x64xf32> to vector<16x64xf32>
    %10 = arith.addf %7, %9 : vector<16x64xf32>
    %c0_12 = arith.constant 0 : index
    %c0_13 = arith.constant 0 : index
    %11 = vector.load %arg6[%c0_12, %c0_13] : memref<64x64xbf16, #tpu.memory_space<vmem>>, vector<64x64xbf16>
    %cst_14 = arith.constant dense<0.000000e+00> : vector<16x64xf32>
    %12 = tpu.matmul %3, %11, %cst_14 {dimension_numbers = #tpu.dot_dimension_numbers<[1], [0], [0], [1], [0, 0, 1, 1], [], []>} : vector<16x64xbf16>, vector<64x64xbf16>, vector<16x64xf32> -> vector<16x64xf32>
    %c0_15 = arith.constant 0 : index
    %c0_16 = arith.constant 0 : index
    %13 = vector.load %arg7[%c0_15, %c0_16] : memref<1x64xf32, #tpu.memory_space<vmem>>, vector<1x64xf32>
    %14 = vector.broadcast %13 : vector<1x64xf32> to vector<16x64xf32>
    %15 = arith.addf %12, %14 : vector<16x64xf32>
    %c0_17 = arith.constant 0 : index
    %c0_18 = arith.constant 0 : index
    %16 = vector.load %arg8[%c0_17, %c0_18] : memref<64x64xbf16, #tpu.memory_space<vmem>>, vector<64x64xbf16>
    %cst_19 = arith.constant dense<0.000000e+00> : vector<16x64xf32>
    %17 = tpu.matmul %5, %16, %cst_19 {dimension_numbers = #tpu.dot_dimension_numbers<[1], [0], [0], [1], [0, 0, 1, 1], [], []>} : vector<16x64xbf16>, vector<64x64xbf16>, vector<16x64xf32> -> vector<16x64xf32>
    %c0_20 = arith.constant 0 : index
    %c0_21 = arith.constant 0 : index
    %18 = vector.load %arg9[%c0_20, %c0_21] : memref<1x64xf32, #tpu.memory_space<vmem>>, vector<1x64xf32>
    %19 = vector.broadcast %18 : vector<1x64xf32> to vector<16x64xf32>
    %20 = arith.addf %17, %19 : vector<16x64xf32>
    %21 = vector.extract_strided_slice %10 {offsets = [0, 0], sizes = [16, 16], strides = [1, 1]} : vector<16x64xf32> to vector<16x16xf32>
    %22 = vector.shape_cast %21 : vector<16x16xf32> to vector<1x16x16xf32>
    %23 = arith.truncf %22 : vector<1x16x16xf32> to vector<1x16x16xbf16>
    %24 = vector.extract_strided_slice %15 {offsets = [0, 0], sizes = [16, 16], strides = [1, 1]} : vector<16x64xf32> to vector<16x16xf32>
    %25 = vector.shape_cast %24 : vector<16x16xf32> to vector<1x16x16xf32>
    %26 = arith.truncf %25 : vector<1x16x16xf32> to vector<1x16x16xbf16>
    %27 = vector.extract_strided_slice %20 {offsets = [0, 0], sizes = [16, 16], strides = [1, 1]} : vector<16x64xf32> to vector<16x16xf32>
    %28 = vector.shape_cast %27 : vector<16x16xf32> to vector<1x16x16xf32>
    %29 = arith.truncf %28 : vector<1x16x16xf32> to vector<1x16x16xbf16>
    "tpu.trace_start"() <{level = 10 : i32, message = "bqd,bkd->bqk"}> : () -> ()
    %cst_22 = arith.constant dense<0.000000e+00> : vector<1x16x16xf32>
    %30 = tpu.matmul %23, %26, %cst_22 {dimension_numbers = #tpu.dot_dimension_numbers<[2], [2], [1], [1], [0, 0, 0, 1, 1, 1], [0], [0]>} : vector<1x16x16xbf16>, vector<1x16x16xbf16>, vector<1x16x16xf32> -> vector<1x16x16xf32>
    "tpu.trace_stop"() : () -> ()
    %cst_23 = arith.constant dense<0xFF800000> : vector<1x16xf32>
    %31 = vector.multi_reduction <maximumf>, %30, %cst_23 [2] : vector<1x16x16xf32> to vector<1x16xf32>
    %32 = vector.shape_cast %31 : vector<1x16xf32> to vector<1x16x1xf32>
    %33 = vector.broadcast %32 : vector<1x16x1xf32> to vector<1x16x16xf32>
    %34 = arith.subf %30, %33 : vector<1x16x16xf32>
    %35 = math.exp %34 : vector<1x16x16xf32>
    %cst_24 = arith.constant dense<0.000000e+00> : vector<1x16xf32>
    %36 = vector.multi_reduction <add>, %35, %cst_24 [2] : vector<1x16x16xf32> to vector<1x16xf32>
    %37 = vector.shape_cast %36 : vector<1x16xf32> to vector<1x16x1xf32>
    %38 = tpu.reciprocal %37 {approx = true} : vector<1x16x1xf32> -> vector<1x16x1xf32>
    %39 = vector.broadcast %38 : vector<1x16x1xf32> to vector<1x16x16xf32>
    %40 = arith.mulf %35, %39 : vector<1x16x16xf32>
    %41 = arith.truncf %40 : vector<1x16x16xf32> to vector<1x16x16xbf16>
    "tpu.trace_start"() <{level = 10 : i32, message = "bqk,bkv->bqv"}> : () -> ()
    %cst_25 = arith.constant dense<0.000000e+00> : vector<1x16x16xf32>
    %42 = tpu.matmul %41, %29, %cst_25 {dimension_numbers = #tpu.dot_dimension_numbers<[2], [1], [1], [2], [0, 0, 0, 1, 1, 2], [0], [0]>} : vector<1x16x16xbf16>, vector<1x16x16xbf16>, vector<1x16x16xf32> -> vector<1x16x16xf32>
    "tpu.trace_stop"() : () -> ()
    %43 = vector.shape_cast %42 : vector<1x16x16xf32> to vector<16x16xf32>
    %44 = vector.extract_strided_slice %10 {offsets = [0, 16], sizes = [16, 16], strides = [1, 1]} : vector<16x64xf32> to vector<16x16xf32>
    %45 = vector.shape_cast %44 : vector<16x16xf32> to vector<1x16x16xf32>
    %46 = arith.truncf %45 : vector<1x16x16xf32> to vector<1x16x16xbf16>
    %47 = vector.extract_strided_slice %15 {offsets = [0, 16], sizes = [16, 16], strides = [1, 1]} : vector<16x64xf32> to vector<16x16xf32>
    %48 = vector.shape_cast %47 : vector<16x16xf32> to vector<1x16x16xf32>
    %49 = arith.truncf %48 : vector<1x16x16xf32> to vector<1x16x16xbf16>
    %50 = vector.extract_strided_slice %20 {offsets = [0, 16], sizes = [16, 16], strides = [1, 1]} : vector<16x64xf32> to vector<16x16xf32>
    %51 = vector.shape_cast %50 : vector<16x16xf32> to vector<1x16x16xf32>
    %52 = arith.truncf %51 : vector<1x16x16xf32> to vector<1x16x16xbf16>
    "tpu.trace_start"() <{level = 10 : i32, message = "bqd,bkd->bqk"}> : () -> ()
    %cst_26 = arith.constant dense<0.000000e+00> : vector<1x16x16xf32>
    %53 = tpu.matmul %46, %49, %cst_26 {dimension_numbers = #tpu.dot_dimension_numbers<[2], [2], [1], [1], [0, 0, 0, 1, 1, 1], [0], [0]>} : vector<1x16x16xbf16>, vector<1x16x16xbf16>, vector<1x16x16xf32> -> vector<1x16x16xf32>
    "tpu.trace_stop"() : () -> ()
    %cst_27 = arith.constant dense<0xFF800000> : vector<1x16xf32>
    %54 = vector.multi_reduction <maximumf>, %53, %cst_27 [2] : vector<1x16x16xf32> to vector<1x16xf32>
    %55 = vector.shape_cast %54 : vector<1x16xf32> to vector<1x16x1xf32>
    %56 = vector.broadcast %55 : vector<1x16x1xf32> to vector<1x16x16xf32>
    %57 = arith.subf %53, %56 : vector<1x16x16xf32>
    %58 = math.exp %57 : vector<1x16x16xf32>
    %cst_28 = arith.constant dense<0.000000e+00> : vector<1x16xf32>
    %59 = vector.multi_reduction <add>, %58, %cst_28 [2] : vector<1x16x16xf32> to vector<1x16xf32>
    %60 = vector.shape_cast %59 : vector<1x16xf32> to vector<1x16x1xf32>
    %61 = tpu.reciprocal %60 {approx = true} : vector<1x16x1xf32> -> vector<1x16x1xf32>
    %62 = vector.broadcast %61 : vector<1x16x1xf32> to vector<1x16x16xf32>
    %63 = arith.mulf %58, %62 : vector<1x16x16xf32>
    %64 = arith.truncf %63 : vector<1x16x16xf32> to vector<1x16x16xbf16>
    "tpu.trace_start"() <{level = 10 : i32, message = "bqk,bkv->bqv"}> : () -> ()
    %cst_29 = arith.constant dense<0.000000e+00> : vector<1x16x16xf32>
    %65 = tpu.matmul %64, %52, %cst_29 {dimension_numbers = #tpu.dot_dimension_numbers<[2], [1], [1], [2], [0, 0, 0, 1, 1, 2], [0], [0]>} : vector<1x16x16xbf16>, vector<1x16x16xbf16>, vector<1x16x16xf32> -> vector<1x16x16xf32>
    "tpu.trace_stop"() : () -> ()
    %66 = vector.shape_cast %65 : vector<1x16x16xf32> to vector<16x16xf32>
    %67 = vector.extract_strided_slice %10 {offsets = [0, 32], sizes = [16, 16], strides = [1, 1]} : vector<16x64xf32> to vector<16x16xf32>
    %68 = vector.shape_cast %67 : vector<16x16xf32> to vector<1x16x16xf32>
    %69 = arith.truncf %68 : vector<1x16x16xf32> to vector<1x16x16xbf16>
    %70 = vector.extract_strided_slice %15 {offsets = [0, 32], sizes = [16, 16], strides = [1, 1]} : vector<16x64xf32> to vector<16x16xf32>
    %71 = vector.shape_cast %70 : vector<16x16xf32> to vector<1x16x16xf32>
    %72 = arith.truncf %71 : vector<1x16x16xf32> to vector<1x16x16xbf16>
    %73 = vector.extract_strided_slice %20 {offsets = [0, 32], sizes = [16, 16], strides = [1, 1]} : vector<16x64xf32> to vector<16x16xf32>
    %74 = vector.shape_cast %73 : vector<16x16xf32> to vector<1x16x16xf32>
    %75 = arith.truncf %74 : vector<1x16x16xf32> to vector<1x16x16xbf16>
    "tpu.trace_start"() <{level = 10 : i32, message = "bqd,bkd->bqk"}> : () -> ()
    %cst_30 = arith.constant dense<0.000000e+00> : vector<1x16x16xf32>
    %76 = tpu.matmul %69, %72, %cst_30 {dimension_numbers = #tpu.dot_dimension_numbers<[2], [2], [1], [1], [0, 0, 0, 1, 1, 1], [0], [0]>} : vector<1x16x16xbf16>, vector<1x16x16xbf16>, vector<1x16x16xf32> -> vector<1x16x16xf32>
    "tpu.trace_stop"() : () -> ()
    %cst_31 = arith.constant dense<0xFF800000> : vector<1x16xf32>
    %77 = vector.multi_reduction <maximumf>, %76, %cst_31 [2] : vector<1x16x16xf32> to vector<1x16xf32>
    %78 = vector.shape_cast %77 : vector<1x16xf32> to vector<1x16x1xf32>
    %79 = vector.broadcast %78 : vector<1x16x1xf32> to vector<1x16x16xf32>
    %80 = arith.subf %76, %79 : vector<1x16x16xf32>
    %81 = math.exp %80 : vector<1x16x16xf32>
    %cst_32 = arith.constant dense<0.000000e+00> : vector<1x16xf32>
    %82 = vector.multi_reduction <add>, %81, %cst_32 [2] : vector<1x16x16xf32> to vector<1x16xf32>
    %83 = vector.shape_cast %82 : vector<1x16xf32> to vector<1x16x1xf32>
    %84 = tpu.reciprocal %83 {approx = true} : vector<1x16x1xf32> -> vector<1x16x1xf32>
    %85 = vector.broadcast %84 : vector<1x16x1xf32> to vector<1x16x16xf32>
    %86 = arith.mulf %81, %85 : vector<1x16x16xf32>
    %87 = arith.truncf %86 : vector<1x16x16xf32> to vector<1x16x16xbf16>
    "tpu.trace_start"() <{level = 10 : i32, message = "bqk,bkv->bqv"}> : () -> ()
    %cst_33 = arith.constant dense<0.000000e+00> : vector<1x16x16xf32>
    %88 = tpu.matmul %87, %75, %cst_33 {dimension_numbers = #tpu.dot_dimension_numbers<[2], [1], [1], [2], [0, 0, 0, 1, 1, 2], [0], [0]>} : vector<1x16x16xbf16>, vector<1x16x16xbf16>, vector<1x16x16xf32> -> vector<1x16x16xf32>
    "tpu.trace_stop"() : () -> ()
    %89 = vector.shape_cast %88 : vector<1x16x16xf32> to vector<16x16xf32>
    %90 = vector.extract_strided_slice %10 {offsets = [0, 48], sizes = [16, 16], strides = [1, 1]} : vector<16x64xf32> to vector<16x16xf32>
    %91 = vector.shape_cast %90 : vector<16x16xf32> to vector<1x16x16xf32>
    %92 = arith.truncf %91 : vector<1x16x16xf32> to vector<1x16x16xbf16>
    %93 = vector.extract_strided_slice %15 {offsets = [0, 48], sizes = [16, 16], strides = [1, 1]} : vector<16x64xf32> to vector<16x16xf32>
    %94 = vector.shape_cast %93 : vector<16x16xf32> to vector<1x16x16xf32>
    %95 = arith.truncf %94 : vector<1x16x16xf32> to vector<1x16x16xbf16>
    %96 = vector.extract_strided_slice %20 {offsets = [0, 48], sizes = [16, 16], strides = [1, 1]} : vector<16x64xf32> to vector<16x16xf32>
    %97 = vector.shape_cast %96 : vector<16x16xf32> to vector<1x16x16xf32>
    %98 = arith.truncf %97 : vector<1x16x16xf32> to vector<1x16x16xbf16>
    "tpu.trace_start"() <{level = 10 : i32, message = "bqd,bkd->bqk"}> : () -> ()
    %cst_34 = arith.constant dense<0.000000e+00> : vector<1x16x16xf32>
    %99 = tpu.matmul %92, %95, %cst_34 {dimension_numbers = #tpu.dot_dimension_numbers<[2], [2], [1], [1], [0, 0, 0, 1, 1, 1], [0], [0]>} : vector<1x16x16xbf16>, vector<1x16x16xbf16>, vector<1x16x16xf32> -> vector<1x16x16xf32>
    "tpu.trace_stop"() : () -> ()
    %cst_35 = arith.constant dense<0xFF800000> : vector<1x16xf32>
    %100 = vector.multi_reduction <maximumf>, %99, %cst_35 [2] : vector<1x16x16xf32> to vector<1x16xf32>
    %101 = vector.shape_cast %100 : vector<1x16xf32> to vector<1x16x1xf32>
    %102 = vector.broadcast %101 : vector<1x16x1xf32> to vector<1x16x16xf32>
    %103 = arith.subf %99, %102 : vector<1x16x16xf32>
    %104 = math.exp %103 : vector<1x16x16xf32>
    %cst_36 = arith.constant dense<0.000000e+00> : vector<1x16xf32>
    %105 = vector.multi_reduction <add>, %104, %cst_36 [2] : vector<1x16x16xf32> to vector<1x16xf32>
    %106 = vector.shape_cast %105 : vector<1x16xf32> to vector<1x16x1xf32>
    %107 = tpu.reciprocal %106 {approx = true} : vector<1x16x1xf32> -> vector<1x16x1xf32>
    %108 = vector.broadcast %107 : vector<1x16x1xf32> to vector<1x16x16xf32>
    %109 = arith.mulf %104, %108 : vector<1x16x16xf32>
    %110 = arith.truncf %109 : vector<1x16x16xf32> to vector<1x16x16xbf16>
    "tpu.trace_start"() <{level = 10 : i32, message = "bqk,bkv->bqv"}> : () -> ()
    %cst_37 = arith.constant dense<0.000000e+00> : vector<1x16x16xf32>
    %111 = tpu.matmul %110, %98, %cst_37 {dimension_numbers = #tpu.dot_dimension_numbers<[2], [1], [1], [2], [0, 0, 0, 1, 1, 2], [0], [0]>} : vector<1x16x16xbf16>, vector<1x16x16xbf16>, vector<1x16x16xf32> -> vector<1x16x16xf32>
    "tpu.trace_stop"() : () -> ()
    %112 = vector.shape_cast %111 : vector<1x16x16xf32> to vector<16x16xf32>
    %113 = tpu.concatenate %43, %66, %89, %112 in 1 : vector<16x16xf32>, vector<16x16xf32>, vector<16x16xf32>, vector<16x16xf32> -> vector<16x64xf32>
    %114 = arith.truncf %113 : vector<16x64xf32> to vector<16x64xbf16>
    %c0_38 = arith.constant 0 : index
    %c0_39 = arith.constant 0 : index
    %115 = vector.load %arg10[%c0_38, %c0_39] : memref<64x128xbf16, #tpu.memory_space<vmem>>, vector<64x128xbf16>
    %cst_40 = arith.constant dense<0.000000e+00> : vector<16x128xf32>
    %116 = tpu.matmul %114, %115, %cst_40 {dimension_numbers = #tpu.dot_dimension_numbers<[1], [0], [0], [1], [0, 0, 1, 1], [], []>} : vector<16x64xbf16>, vector<64x128xbf16>, vector<16x128xf32> -> vector<16x128xf32>
    %c0_41 = arith.constant 0 : index
    %c0_42 = arith.constant 0 : index
    %117 = vector.load %arg11[%c0_41, %c0_42] : memref<1x128xf32, #tpu.memory_space<vmem>>, vector<1x128xf32>
    %118 = vector.broadcast %117 : vector<1x128xf32> to vector<16x128xf32>
    %119 = arith.addf %116, %118 : vector<16x128xf32>
    %120 = vector.shape_cast %119 : vector<16x128xf32> to vector<1x16x128xf32>
    %c0_43 = arith.constant 0 : index
    %c0_44 = arith.constant 0 : index
    %c0_45 = arith.constant 0 : index
    %121 = vector.load %arg12[%c0_43, %c0_44, %c0_45] : memref<1x16x128xf32, #tpu.memory_space<vmem>>, vector<1x16x128xf32>
    tpu.vector_store %arg12[%c0_43, %c0_44, %c0_45], %120 {strides = array<i32>} : memref<1x16x128xf32, #tpu.memory_space<vmem>>, vector<1x16x128xf32>,
    return
  }
  func.func @transform_0(%arg0: i32) -> (i32, i32, i32) {
    %c0_i32 = arith.constant 0 : i32
    %c0_i32_0 = arith.constant 0 : i32
    %c0_i32_1 = arith.constant 0 : i32
    return %arg0, %c0_i32, %c0_i32_0 : i32, i32, i32
  }
  func.func @transform_1(%arg0: i32) -> (i32, i32, i32) {
    %c0_i32 = arith.constant 0 : i32
    %c0_i32_0 = arith.constant 0 : i32
    %c0_i32_1 = arith.constant 0 : i32
    return %arg0, %c0_i32, %c0_i32_0 : i32, i32, i32
  }
  func.func @transform_2(%arg0: i32) -> (i32, i32, i32) {
    %c0_i32 = arith.constant 0 : i32
    %c0_i32_0 = arith.constant 0 : i32
    %c0_i32_1 = arith.constant 0 : i32
    return %arg0, %c0_i32, %c0_i32_0 : i32, i32, i32
  }
  func.func @transform_3(%arg0: i32) -> (i32, i32) {
    %c0_i32 = arith.constant 0 : i32
    %c0_i32_0 = arith.constant 0 : i32
    %c0_i32_1 = arith.constant 0 : i32
    return %c0_i32, %c0_i32_0 : i32, i32
  }
  func.func @transform_4(%arg0: i32) -> (i32, i32) {
    %c0_i32 = arith.constant 0 : i32
    %c0_i32_0 = arith.constant 0 : i32
    %c0_i32_1 = arith.constant 0 : i32
    return %c0_i32, %c0_i32_0 : i32, i32
  }
  func.func @transform_5(%arg0: i32) -> (i32, i32) {
    %c0_i32 = arith.constant 0 : i32
    %c0_i32_0 = arith.constant 0 : i32
    %c0_i32_1 = arith.constant 0 : i32
    return %c0_i32, %c0_i32_0 : i32, i32
  }
  func.func @transform_6(%arg0: i32) -> (i32, i32) {
    %c0_i32 = arith.constant 0 : i32
    %c0_i32_0 = arith.constant 0 : i32
    %c0_i32_1 = arith.constant 0 : i32
    return %c0_i32, %c0_i32_0 : i32, i32
  }
  func.func @transform_7(%arg0: i32) -> (i32, i32) {
    %c0_i32 = arith.constant 0 : i32
    %c0_i32_0 = arith.constant 0 : i32
    %c0_i32_1 = arith.constant 0 : i32
    return %c0_i32, %c0_i32_0 : i32, i32
  }
  func.func @transform_8(%arg0: i32) -> (i32, i32) {
    %c0_i32 = arith.constant 0 : i32
    %c0_i32_0 = arith.constant 0 : i32
    %c0_i32_1 = arith.constant 0 : i32
    return %c0_i32, %c0_i32_0 : i32, i32
  }
  func.func @transform_9(%arg0: i32) -> (i32, i32) {
    %c0_i32 = arith.constant 0 : i32
    %c0_i32_0 = arith.constant 0 : i32
    %c0_i32_1 = arith.constant 0 : i32
    return %c0_i32, %c0_i32_0 : i32, i32
  }
  func.func @transform_10(%arg0: i32) -> (i32, i32) {
    %c0_i32 = arith.constant 0 : i32
    %c0_i32_0 = arith.constant 0 : i32
    %c0_i32_1 = arith.constant 0 : i32
    return %c0_i32, %c0_i32_0 : i32, i32
  }
  func.func @transform_11(%arg0: i32) -> (i32, i32, i32) {
    %c0_i32 = arith.constant 0 : i32
    %c0_i32_0 = arith.constant 0 : i32
    %c0_i32_1 = arith.constant 0 : i32
    return %arg0, %c0_i32, %c0_i32_0 : i32, i32, i32
  }
}

</mosaic_0001>

<llo_original>
// kernel: tpu_custom_call.1
$region0: #{tpu_custom_call.1}
  #allocation0 [shape = 'u32[]', space=smem, size = 0x4, offset = 0x4, fixed_abs, tag = 'smem constant byte address 0x4 - core index']
  #allocation1 [shape = 'u32[144,128]{1,0:T(1,128)}', space=vmem, size = 0x12000, scoped, tag = 'internal scratch']
  %s0 = inlined_call_operand.hbm [shape: bf16[2,16,64], index: 0, kind: input, shape index: {}]
  %s1 = inlined_call_operand.hbm [shape: bf16[2,16,64], index: 1, kind: input, shape index: {}]
  %s2 = inlined_call_operand.hbm [shape: bf16[2,16,64], index: 2, kind: input, shape index: {}]
  %s3 = inlined_call_operand.hbm [shape: bf16[64,64], index: 3, kind: input, shape index: {}]
  %s4 = inlined_call_operand.vmem [shape: f32[1,64], index: 4, kind: input, shape index: {}]
  %s5 = inlined_call_operand.hbm [shape: bf16[64,64], index: 5, kind: input, shape index: {}]
  %s6 = inlined_call_operand.vmem [shape: f32[1,64], index: 6, kind: input, shape index: {}]
  %s7 = inlined_call_operand.hbm [shape: bf16[64,64], index: 7, kind: input, shape index: {}]
  %s8 = inlined_call_operand.vmem [shape: f32[1,64], index: 8, kind: input, shape index: {}]
  %s9 = inlined_call_operand.hbm [shape: bf16[64,128], index: 9, kind: input, shape index: {}]
  %s10 = inlined_call_operand.vmem [shape: f32[1,128], index: 10, kind: input, shape index: {}]
  %s11 = inlined_call_operand.hbm [shape: f32[2,16,128], index: 11, kind: output, shape index: {}]
  %s12 = sld [smem:[#allocation0]]
  $region105: #{tpu_custom_call.1} parent=0
    _
  %s14 = ssub.s32 1, %s12
  %s15 = scalar_select 0, %s14, %s12
  $region1: #{tpu_custom_call.1} parent=0
    #allocation2 [shape = 'u8[8192]{0}', space=vmem, size = 0x2000, scoped, tag = 'input window, operand 0']
    #allocation3 [shape = 's32[2]{0}', space=sflag, size = 0x8, scoped, tag = 'scoped memory for tpu_custom_call.1']
    #allocation4 [shape = 's32[2]{0}', space=sflag, size = 0x8, scoped, tag = 'scoped memory for tpu_custom_call.1']
    #allocation5 [shape = 'u8[8192]{0}', space=vmem, size = 0x2000, scoped, tag = 'input window, operand 1']
    #allocation6 [shape = 's32[2]{0}', space=sflag, size = 0x8, scoped, tag = 'scoped memory for tpu_custom_call.1']
    #allocation7 [shape = 'u8[8192]{0}', space=vmem, size = 0x2000, scoped, tag = 'input window, operand 2']
    #allocation8 [shape = 'u8[16384]{0}', space=vmem, size = 0x4000, scoped, tag = 'input window, operand 3, single buffered']
    #allocation9 [shape = 's32[1]{0}', space=sflag, size = 0x4, scoped, tag = 'scoped memory for tpu_custom_call.1']
    #allocation10 [shape = 'u8[16384]{0}', space=vmem, size = 0x4000, scoped, tag = 'input window, operand 5, single buffered']
    #allocation11 [shape = 'u8[16384]{0}', space=vmem, size = 0x4000, scoped, tag = 'input window, operand 7, single buffered']
    #allocation12 [shape = 's32[1]{0}', space=sflag, size = 0x4, scoped, tag = 'scoped memory for tpu_custom_call.1']
    #allocation13 [shape = 'u8[16384]{0}', space=vmem, size = 0x4000, scoped, tag = 'input window, operand 9, single buffered']
    #allocation14 [shape = 'u8[16384]{0}', space=vmem, size = 0x4000, scoped, tag = 'output window, operand 0']
    %16 = vsyncpa [#allocation3], 0
    %s17 = scalar_lea.sflag [#allocation3], 1
    %18 = vsyncpa %s17, 0
    %19 = vsyncpa [#allocation6], 0
    %s20 = scalar_lea.sflag [#allocation6], 1
    %21 = vsyncpa %s20, 0
    %22 = vsyncpa [#allocation9], 0
    %23 = vsyncpa [#allocation12], 0
    %24 = vsyncpa [#allocation4], 0
    %s25 = scalar_lea.sflag [#allocation4], 1
    %26 = vsyncpa %s25, 0
    loop: start=0, step=1, limit=4
    $region2: #{tpu_custom_call.1} parent=1 // loop_pre_header
      _
    $region3: #{tpu_custom_call.1} parent=1 // loop_header
      %s28 = sphi 0, %s32
      %p29 = scmp.ge.s32.totalorder %s28, 4
      %s38 = sphi 0, %s40
      %s41 = sphi 0, %s38
      %s42 = sphi 0, %s41
      %s58 = sphi 0, %s42
      %s64 = sphi 0, %s66
      %s67 = sphi 0, %s64
      %s68 = sphi 0, %s67
      %s84 = sphi 0, %s68
      %s90 = sphi 0, %s92
      %s93 = sphi 0, %s90
      %s94 = sphi 0, %s93
      %s110 = sphi 0, %s94
      %s114 = sphi 0, %s114
      %s116 = sphi 0, %s114
      %s117 = sphi 0, %s116
      %s131 = sphi 0, %s117
      %s135 = sphi 0, %s135
      %s137 = sphi 0, %s135
      %s138 = sphi 0, %s137
      %s152 = sphi 0, %s138
      %s156 = sphi 0, %s156
      %s158 = sphi 0, %s156
      %s159 = sphi 0, %s158
      %s173 = sphi 0, %s159
      %s177 = sphi 0, %s177
      %s179 = sphi 0, %s177
      %s180 = sphi 0, %s179
      %s194 = sphi 0, %s180
      %s198 = sphi 0, %s198
      %s200 = sphi 0, %s198
      %s201 = sphi 0, %s200
      %s215 = sphi 0, %s201
      %s219 = sphi 0, %s219
      %s221 = sphi 0, %s219
      %s222 = sphi 0, %s221
      %s236 = sphi 0, %s222
      %s240 = sphi 0, %s240
      %s242 = sphi 0, %s240
      %s243 = sphi 0, %s242
      %s257 = sphi 0, %s243
      %s261 = sphi 0, %s261
      %s263 = sphi 0, %s261
      %s264 = sphi 0, %s263
      %s278 = sphi 0, %s264
      %s284 = sphi 0, %s286
      %s287 = sphi 0, %s284
      %s288 = sphi 0, %s287
      %s304 = sphi 0, %s288
    $region4: #{tpu_custom_call.1} parent=1 // loop_header_branch
      %31 = sbr.rel (%p29) target = $region8
    $region5: #{tpu_custom_call.1} parent=1 // loop_body
      %s33 = ssub.s32 %s28, 1
      %s34 = ssub.s32 %s28, 2
      %s35 = sadd.s32 %s28, 1
      %s36 = ssub.s32 %s28, %s35
      %p37 = scmp.eq.s32.totalorder %s36, 0
      %s39 = sadd.s32 %s38, 1
      %s40 = scalar_select %p37, %s38, %s39
      %p43 = pneg %p37
      %p44 = scmp.eq.s32.totalorder %s28, 1
      %p45 = por %p43, %p44
      %p46 = scmp.ne.s32.totalorder %s38, %s41
      %p47 = scmp.eq.s32.totalorder %s28, 0
      %p48 = por %p46, %p47
      %p49 = scmp.ne.s32.totalorder %s38, %s41
      %p50 = scmp.eq.s32.totalorder %s33, 1
      %p51 = por %p49, %p50
      %p52 = scmp.ne.s32.totalorder %s41, %s42
      %p53 = scmp.eq.s32.totalorder %s33, 0
      %p54 = por %p52, %p53
      %p55 = scmp.ne.s32.totalorder %s41, %s42
      %p56 = scmp.eq.s32.totalorder %s34, 1
      %p57 = por %p55, %p56
      %p59 = scmp.ne.s32.totalorder %s42, %s58
      %p60 = scmp.eq.s32.totalorder %s34, 0
      %p61 = por %p59, %p60
      %s62 = ssub.s32 %s28, %s35
      %p63 = scmp.eq.s32.totalorder %s62, 0
      %s65 = sadd.s32 %s64, 1
      %s66 = scalar_select %p63, %s64, %s65
      %p69 = pneg %p63
      %p70 = scmp.eq.s32.totalorder %s28, 1
      %p71 = por %p69, %p70
      %p72 = scmp.ne.s32.totalorder %s64, %s67
      %p73 = scmp.eq.s32.totalorder %s28, 0
      %p74 = por %p72, %p73
      %p75 = scmp.ne.s32.totalorder %s64, %s67
      %p76 = scmp.eq.s32.totalorder %s33, 1
      %p77 = por %p75, %p76
      %p78 = scmp.ne.s32.totalorder %s67, %s68
      %p79 = scmp.eq.s32.totalorder %s33, 0
      %p80 = por %p78, %p79
      %p81 = scmp.ne.s32.totalorder %s67, %s68
      %p82 = scmp.eq.s32.totalorder %s34, 1
      %p83 = por %p81, %p82
      %p85 = scmp.ne.s32.totalorder %s68, %s84
      %p86 = scmp.eq.s32.totalorder %s34, 0
      %p87 = por %p85, %p86
      %s88 = ssub.s32 %s28, %s35
      %p89 = scmp.eq.s32.totalorder %s88, 0
      %s91 = sadd.s32 %s90, 1
      %s92 = scalar_select %p89, %s90, %s91
      %p95 = pneg %p89
      %p96 = scmp.eq.s32.totalorder %s28, 1
      %p97 = por %p95, %p96
      %p98 = scmp.ne.s32.totalorder %s90, %s93
      %p99 = scmp.eq.s32.totalorder %s28, 0
      %p100 = por %p98, %p99
      %p101 = scmp.ne.s32.totalorder %s90, %s93
      %p102 = scmp.eq.s32.totalorder %s33, 1
      %p103 = por %p101, %p102
      %p104 = scmp.ne.s32.totalorder %s93, %s94
      %p105 = scmp.eq.s32.totalorder %s33, 0
      %p106 = por %p104, %p105
      %p107 = scmp.ne.s32.totalorder %s93, %s94
      %p108 = scmp.eq.s32.totalorder %s34, 1
      %p109 = por %p107, %p108
      %p111 = scmp.ne.s32.totalorder %s94, %s110
      %p112 = scmp.eq.s32.totalorder %s34, 0
      %p113 = por %p111, %p112
      %s115 = sadd.s32 %s114, 1
      %p118 = scmp.eq.s32.totalorder %s28, 1
      %p119 = scmp.ne.s32.totalorder %s114, %s116
      %p120 = scmp.eq.s32.totalorder %s28, 0
      %p121 = por %p119, %p120
      %p122 = scmp.ne.s32.totalorder %s114, %s116
      %p123 = scmp.eq.s32.totalorder %s33, 1
      %p124 = por %p122, %p123
      %p125 = scmp.ne.s32.totalorder %s116, %s117
      %p126 = scmp.eq.s32.totalorder %s33, 0
      %p127 = por %p125, %p126
      %p128 = scmp.ne.s32.totalorder %s116, %s117
      %p129 = scmp.eq.s32.totalorder %s34, 1
      %p130 = por %p128, %p129
      %p132 = scmp.ne.s32.totalorder %s117, %s131
      %p133 = scmp.eq.s32.totalorder %s34, 0
      %p134 = por %p132, %p133
      %s136 = sadd.s32 %s135, 1
      %p139 = scmp.eq.s32.totalorder %s28, 1
      %p140 = scmp.ne.s32.totalorder %s135, %s137
      %p141 = scmp.eq.s32.totalorder %s28, 0
      %p142 = por %p140, %p141
      %p143 = scmp.ne.s32.totalorder %s135, %s137
      %p144 = scmp.eq.s32.totalorder %s33, 1
      %p145 = por %p143, %p144
      %p146 = scmp.ne.s32.totalorder %s137, %s138
      %p147 = scmp.eq.s32.totalorder %s33, 0
      %p148 = por %p146, %p147
      %p149 = scmp.ne.s32.totalorder %s137, %s138
      %p150 = scmp.eq.s32.totalorder %s34, 1
      %p151 = por %p149, %p150
      %p153 = scmp.ne.s32.totalorder %s138, %s152
      %p154 = scmp.eq.s32.totalorder %s34, 0
      %p155 = por %p153, %p154
      %s157 = sadd.s32 %s156, 1
      %p160 = scmp.eq.s32.totalorder %s28, 1
      %p161 = scmp.ne.s32.totalorder %s156, %s158
      %p162 = scmp.eq.s32.totalorder %s28, 0
      %p163 = por %p161, %p162
      %p164 = scmp.ne.s32.totalorder %s156, %s158
      %p165 = scmp.eq.s32.totalorder %s33, 1
      %p166 = por %p164, %p165
      %p167 = scmp.ne.s32.totalorder %s158, %s159
      %p168 = scmp.eq.s32.totalorder %s33, 0
      %p169 = por %p167, %p168
      %p170 = scmp.ne.s32.totalorder %s158, %s159
      %p171 = scmp.eq.s32.totalorder %s34, 1
      %p172 = por %p170, %p171
      %p174 = scmp.ne.s32.totalorder %s159, %s173
      %p175 = scmp.eq.s32.totalorder %s34, 0
      %p176 = por %p174, %p175
      %s178 = sadd.s32 %s177, 1
      %p181 = scmp.eq.s32.totalorder %s28, 1
      %p182 = scmp.ne.s32.totalorder %s177, %s179
      %p183 = scmp.eq.s32.totalorder %s28, 0
      %p184 = por %p182, %p183
      %p185 = scmp.ne.s32.totalorder %s177, %s179
      %p186 = scmp.eq.s32.totalorder %s33, 1
      %p187 = por %p185, %p186
      %p188 = scmp.ne.s32.totalorder %s179, %s180
      %p189 = scmp.eq.s32.totalorder %s33, 0
      %p190 = por %p188, %p189
      %p191 = scmp.ne.s32.totalorder %s179, %s180
      %p192 = scmp.eq.s32.totalorder %s34, 1
      %p193 = por %p191, %p192
      %p195 = scmp.ne.s32.totalorder %s180, %s194
      %p196 = scmp.eq.s32.totalorder %s34, 0
      %p197 = por %p195, %p196
      %s199 = sadd.s32 %s198, 1
      %p202 = scmp.eq.s32.totalorder %s28, 1
      %p203 = scmp.ne.s32.totalorder %s198, %s200
      %p204 = scmp.eq.s32.totalorder %s28, 0
      %p205 = por %p203, %p204
      %p206 = scmp.ne.s32.totalorder %s198, %s200
      %p207 = scmp.eq.s32.totalorder %s33, 1
      %p208 = por %p206, %p207
      %p209 = scmp.ne.s32.totalorder %s200, %s201
      %p210 = scmp.eq.s32.totalorder %s33, 0
      %p211 = por %p209, %p210
      %p212 = scmp.ne.s32.totalorder %s200, %s201
      %p213 = scmp.eq.s32.totalorder %s34, 1
      %p214 = por %p212, %p213
      %p216 = scmp.ne.s32.totalorder %s201, %s215
      %p217 = scmp.eq.s32.totalorder %s34, 0
      %p218 = por %p216, %p217
      %s220 = sadd.s32 %s219, 1
      %p223 = scmp.eq.s32.totalorder %s28, 1
      %p224 = scmp.ne.s32.totalorder %s219, %s221
      %p225 = scmp.eq.s32.totalorder %s28, 0
      %p226 = por %p224, %p225
      %p227 = scmp.ne.s32.totalorder %s219, %s221
      %p228 = scmp.eq.s32.totalorder %s33, 1
      %p229 = por %p227, %p228
      %p230 = scmp.ne.s32.totalorder %s221, %s222
      %p231 = scmp.eq.s32.totalorder %s33, 0
      %p232 = por %p230, %p231
      %p233 = scmp.ne.s32.totalorder %s221, %s222
      %p234 = scmp.eq.s32.totalorder %s34, 1
      %p235 = por %p233, %p234
      %p237 = scmp.ne.s32.totalorder %s222, %s236
      %p238 = scmp.eq.s32.totalorder %s34, 0
      %p239 = por %p237, %p238
      %s241 = sadd.s32 %s240, 1
      %p244 = scmp.eq.s32.totalorder %s28, 1
      %p245 = scmp.ne.s32.totalorder %s240, %s242
      %p246 = scmp.eq.s32.totalorder %s28, 0
      %p247 = por %p245, %p246
      %p248 = scmp.ne.s32.totalorder %s240, %s242
      %p249 = scmp.eq.s32.totalorder %s33, 1
      %p250 = por %p248, %p249
      %p251 = scmp.ne.s32.totalorder %s242, %s243
      %p252 = scmp.eq.s32.totalorder %s33, 0
      %p253 = por %p251, %p252
      %p254 = scmp.ne.s32.totalorder %s242, %s243
      %p255 = scmp.eq.s32.totalorder %s34, 1
      %p256 = por %p254, %p255
      %p258 = scmp.ne.s32.totalorder %s243, %s257
      %p259 = scmp.eq.s32.totalorder %s34, 0
      %p260 = por %p258, %p259
      %s262 = sadd.s32 %s261, 1
      %p265 = scmp.eq.s32.totalorder %s28, 1
      %p266 = scmp.ne.s32.totalorder %s261, %s263
      %p267 = scmp.eq.s32.totalorder %s28, 0
      %p268 = por %p266, %p267
      %p269 = scmp.ne.s32.totalorder %s261, %s263
      %p270 = scmp.eq.s32.totalorder %s33, 1
      %p271 = por %p269, %p270
      %p272 = scmp.ne.s32.totalorder %s263, %s264
      %p273 = scmp.eq.s32.totalorder %s33, 0
      %p274 = por %p272, %p273
      %p275 = scmp.ne.s32.totalorder %s263, %s264
      %p276 = scmp.eq.s32.totalorder %s34, 1
      %p277 = por %p275, %p276
      %p279 = scmp.ne.s32.totalorder %s264, %s278
      %p280 = scmp.eq.s32.totalorder %s34, 0
      %p281 = por %p279, %p280
      %s282 = ssub.s32 %s28, %s35
      %p283 = scmp.eq.s32.totalorder %s282, 0
      %s285 = sadd.s32 %s284, 1
      %s286 = scalar_select %p283, %s284, %s285
      %p289 = pneg %p283
      %p290 = scmp.eq.s32.totalorder %s28, 1
      %p291 = por %p289, %p290
      %p292 = scmp.ne.s32.totalorder %s284, %s287
      %p293 = scmp.eq.s32.totalorder %s28, 0
      %p294 = por %p292, %p293
      %p295 = scmp.ne.s32.totalorder %s284, %s287
      %p296 = scmp.eq.s32.totalorder %s33, 1
      %p297 = por %p295, %p296
      %p298 = scmp.ne.s32.totalorder %s287, %s288
      %p299 = scmp.eq.s32.totalorder %s33, 0
      %p300 = por %p298, %p299
      %p301 = scmp.ne.s32.totalorder %s287, %s288
      %p302 = scmp.eq.s32.totalorder %s34, 1
      %p303 = por %p301, %p302
      %p305 = scmp.ne.s32.totalorder %s288, %s304
      %p306 = scmp.eq.s32.totalorder %s34, 0
      %p307 = por %p305, %p306
      %p308 = scmp.le.s32.totalorder 1, %s28
      %p309 = scmp.lt.s32.totalorder %s28, 3
      %p310 = pnand %p308, %p309
      %p311 = pneg %p310
      // Predicated region
      $region9: #{tpu_custom_call.1} parent=5 // pred_check
        _
      $region10: #{tpu_custom_call.1} parent=5 // pred_check_branch
        %313 = sbr.rel (%p310) target = $region12
      $region11: #{tpu_custom_call.1} parent=5 // pred_region
        %s314 = ssub.s32 %s28, 1
        // Predicated region
        $region13: #{tpu_custom_call.1} parent=11 // pred_check
          %p315 = pneg %p127
        $region14: #{tpu_custom_call.1} parent=11 // pred_check_branch
          %317 = sbr.rel (%p315) target = $region16
        $region15: #{tpu_custom_call.1} parent=11 // pred_region
          %s319 = ssub.s32 512, 512
          %320 = vsyncadd [#allocation9], %s319
          %s321 = sshll.u32 [#allocation8], 4
          %s322 = int_to_ptr.vmem [resolvable:$true] %s321
          %327 = dma.hbm_to_vmem [thread:$0]  %s3, 512, %s322, [#allocation9], 64, 64, 4
        $region16: #{tpu_custom_call.1} parent=11 // pred_fallthru
          _
        // Predicated region
        $region17: #{tpu_custom_call.1} parent=11 // pred_check
          %p328 = pneg %p148
        $region18: #{tpu_custom_call.1} parent=11 // pred_check_branch
          %330 = sbr.rel (%p328) target = $region20
        $region19: #{tpu_custom_call.1} parent=11 // pred_region
          _
        $region20: #{tpu_custom_call.1} parent=11 // pred_fallthru
          _
        // Predicated region
        $region21: #{tpu_custom_call.1} parent=11 // pred_check
          %p331 = pneg %p169
        $region22: #{tpu_custom_call.1} parent=11 // pred_check_branch
          %333 = sbr.rel (%p331) target = $region24
        $region23: #{tpu_custom_call.1} parent=11 // pred_region
          %s335 = ssub.s32 512, 512
          %336 = vsyncadd [#allocation9], %s335
          %s337 = sshll.u32 [#allocation10], 4
          %s338 = int_to_ptr.vmem [resolvable:$true] %s337
          %343 = dma.hbm_to_vmem [thread:$0]  %s5, 512, %s338, [#allocation9], 64, 64, 4
        $region24: #{tpu_custom_call.1} parent=11 // pred_fallthru
          _
        // Predicated region
        $region25: #{tpu_custom_call.1} parent=11 // pred_check
          %p344 = pneg %p190
        $region26: #{tpu_custom_call.1} parent=11 // pred_check_branch
          %346 = sbr.rel (%p344) target = $region28
        $region27: #{tpu_custom_call.1} parent=11 // pred_region
          _
        $region28: #{tpu_custom_call.1} parent=11 // pred_fallthru
          _
        // Predicated region
        $region29: #{tpu_custom_call.1} parent=11 // pred_check
          %p347 = pneg %p211
        $region30: #{tpu_custom_call.1} parent=11 // pred_check_branch
          %349 = sbr.rel (%p347) target = $region32
        $region31: #{tpu_custom_call.1} parent=11 // pred_region
          %s351 = ssub.s32 512, 512
          %352 = vsyncadd [#allocation12], %s351
          %s353 = sshll.u32 [#allocation11], 4
          %s354 = int_to_ptr.vmem [resolvable:$true] %s353
          %359 = dma.hbm_to_vmem [thread:$0]  %s7, 512, %s354, [#allocation12], 64, 64, 4
        $region32: #{tpu_custom_call.1} parent=11 // pred_fallthru
          _
        // Predicated region
        $region33: #{tpu_custom_call.1} parent=11 // pred_check
          %p360 = pneg %p232
        $region34: #{tpu_custom_call.1} parent=11 // pred_check_branch
          %362 = sbr.rel (%p360) target = $region36
        $region35: #{tpu_custom_call.1} parent=11 // pred_region
          _
        $region36: #{tpu_custom_call.1} parent=11 // pred_fallthru
          _
        // Predicated region
        $region37: #{tpu_custom_call.1} parent=11 // pred_check
          %p363 = pneg %p253
        $region38: #{tpu_custom_call.1} parent=11 // pred_check_branch
          %365 = sbr.rel (%p363) target = $region40
        $region39: #{tpu_custom_call.1} parent=11 // pred_region
          %s367 = ssub.s32 512, 512
          %368 = vsyncadd [#allocation12], %s367
          %s369 = sshll.u32 [#allocation13], 4
          %s370 = int_to_ptr.vmem [resolvable:$true] %s369
          %375 = dma.hbm_to_vmem [thread:$0]  %s9, 512, %s370, [#allocation12], 64, 64, 4
        $region40: #{tpu_custom_call.1} parent=11 // pred_fallthru
          _
        // Predicated region
        $region41: #{tpu_custom_call.1} parent=11 // pred_check
          %p376 = pneg %p274
        $region42: #{tpu_custom_call.1} parent=11 // pred_check_branch
          %378 = sbr.rel (%p376) target = $region44
        $region43: #{tpu_custom_call.1} parent=11 // pred_region
          _
        $region44: #{tpu_custom_call.1} parent=11 // pred_fallthru
          _
      $region12: #{tpu_custom_call.1} parent=5 // pred_fallthru
        _
      %p379 = scmp.lt.s32.totalorder %s28, 2
      // Predicated region
      $region45: #{tpu_custom_call.1} parent=5 // pred_check
        %p380 = pneg %p379
      $region46: #{tpu_custom_call.1} parent=5 // pred_check_branch
        %382 = sbr.rel (%p380) target = $region48
      $region47: #{tpu_custom_call.1} parent=5 // pred_region
        // Predicated region
        $region49: #{tpu_custom_call.1} parent=47 // pred_check
          %p383 = pneg %p48
        $region50: #{tpu_custom_call.1} parent=47 // pred_check_branch
          %385 = sbr.rel (%p383) target = $region52
        $region51: #{tpu_custom_call.1} parent=47 // pred_region
          %s386 = sand.u32 %s38, 1
          %s387 = scalar_lea.sflag [#allocation3], %s386
          %s388 = sand.u32 %s38, 1
          %s389 = smul.addr %s388, 8
          %s390 = scalar_lea.vmem [#allocation2], %s389
          %s392 = ssub.s32 128, 128
          %393 = vsyncadd %s387, %s392
          %s394 = smul.addr %s28, 2
          %s395 = smul.addr %s394, 64
          %s396 = scalar_lea.hbm %s0, %s395
          %s397 = sshll.u32 %s390, 4
          %s398 = int_to_ptr.vmem [resolvable:$true] %s397
          %403 = dma.hbm_to_vmem [thread:$0]  %s396, 128, %s398, %s387, 64, 64, 4
        $region52: #{tpu_custom_call.1} parent=47 // pred_fallthru
          _
        // Predicated region
        $region53: #{tpu_custom_call.1} parent=47 // pred_check
          %p404 = pneg %p74
        $region54: #{tpu_custom_call.1} parent=47 // pred_check_branch
          %406 = sbr.rel (%p404) target = $region56
        $region55: #{tpu_custom_call.1} parent=47 // pred_region
          %s407 = sand.u32 %s28, 1
          %s408 = scalar_lea.sflag [#allocation6], %s407
          %s409 = sand.u32 %s64, 1
          %s410 = smul.addr %s409, 8
          %s411 = scalar_lea.vmem [#allocation5], %s410
          %s413 = ssub.s32 128, 128
          %414 = vsyncadd %s408, %s413
          %s415 = smul.addr %s28, 2
          %s416 = smul.addr %s415, 64
          %s417 = scalar_lea.hbm %s1, %s416
          %s418 = sshll.u32 %s411, 4
          %s419 = int_to_ptr.vmem [resolvable:$true] %s418
          %424 = dma.hbm_to_vmem [thread:$0]  %s417, 128, %s419, %s408, 64, 64, 4
        $region56: #{tpu_custom_call.1} parent=47 // pred_fallthru
          _
        // Predicated region
        $region57: #{tpu_custom_call.1} parent=47 // pred_check
          %p425 = pneg %p100
        $region58: #{tpu_custom_call.1} parent=47 // pred_check_branch
          %427 = sbr.rel (%p425) target = $region60
        $region59: #{tpu_custom_call.1} parent=47 // pred_region
          %s428 = sand.u32 %s28, 1
          %s429 = scalar_lea.sflag [#allocation6], %s428
          %s430 = sand.u32 %s90, 1
          %s431 = smul.addr %s430, 8
          %s432 = scalar_lea.vmem [#allocation7], %s431
          %s434 = ssub.s32 128, 128
          %435 = vsyncadd %s429, %s434
          %s436 = smul.addr %s28, 2
          %s437 = smul.addr %s436, 64
          %s438 = scalar_lea.hbm %s2, %s437
          %s439 = sshll.u32 %s432, 4
          %s440 = int_to_ptr.vmem [resolvable:$true] %s439
          %445 = dma.hbm_to_vmem [thread:$0]  %s438, 128, %s440, %s429, 64, 64, 4
        $region60: #{tpu_custom_call.1} parent=47 // pred_fallthru
          _
      $region48: #{tpu_custom_call.1} parent=5 // pred_fallthru
        _
      %p446 = scmp.le.s32.totalorder 1, %s28
      %p447 = scmp.lt.s32.totalorder %s28, 3
      %p448 = pnand %p446, %p447
      %p449 = pneg %p448
      // Predicated region
      $region61: #{tpu_custom_call.1} parent=5 // pred_check
        _
      $region62: #{tpu_custom_call.1} parent=5 // pred_check_branch
        %451 = sbr.rel (%p448) target = $region64
      $region63: #{tpu_custom_call.1} parent=5 // pred_region
        %s452 = ssub.s32 %s28, 1
        %s453 = sand.u32 %s41, 1
        %s454 = scalar_lea.sflag [#allocation3], %s453
        %s455 = sand.u32 %s41, 1
        %s456 = smul.addr %s455, 8
        %s457 = scalar_lea.vmem [#allocation2], %s456
        // Predicated region
        $region65: #{tpu_custom_call.1} parent=63 // pred_check
          %p458 = pneg %p54
        $region66: #{tpu_custom_call.1} parent=63 // pred_check_branch
          %460 = sbr.rel (%p458) target = $region68
        $region67: #{tpu_custom_call.1} parent=63 // pred_region
          %461 = dma.done %s454, 128
        $region68: #{tpu_custom_call.1} parent=63 // pred_fallthru
          _
        %s462 = sand.u32 %s33, 1
        %s463 = scalar_lea.sflag [#allocation6], %s462
        %s464 = sand.u32 %s67, 1
        %s465 = smul.addr %s464, 8
        %s466 = scalar_lea.vmem [#allocation5], %s465
        // Predicated region
        $region69: #{tpu_custom_call.1} parent=63 // pred_check
          %p467 = pneg %p80
        $region70: #{tpu_custom_call.1} parent=63 // pred_check_branch
          %469 = sbr.rel (%p467) target = $region72
        $region71: #{tpu_custom_call.1} parent=63 // pred_region
          %470 = dma.done %s463, 128
        $region72: #{tpu_custom_call.1} parent=63 // pred_fallthru
          _
        %s471 = sand.u32 %s33, 1
        %s472 = scalar_lea.sflag [#allocation6], %s471
        %s473 = sand.u32 %s93, 1
        %s474 = smul.addr %s473, 8
        %s475 = scalar_lea.vmem [#allocation7], %s474
        // Predicated region
        $region73: #{tpu_custom_call.1} parent=63 // pred_check
          %p476 = pneg %p106
        $region74: #{tpu_custom_call.1} parent=63 // pred_check_branch
          %478 = sbr.rel (%p476) target = $region76
        $region75: #{tpu_custom_call.1} parent=63 // pred_region
          %479 = dma.done %s472, 128
        $region76: #{tpu_custom_call.1} parent=63 // pred_fallthru
          _
        // Predicated region
        $region77: #{tpu_custom_call.1} parent=63 // pred_check
          %p480 = pneg %p127
        $region78: #{tpu_custom_call.1} parent=63 // pred_check_branch
          %482 = sbr.rel (%p480) target = $region80
        $region79: #{tpu_custom_call.1} parent=63 // pred_region
          %483 = dma.done [#allocation9], 512
        $region80: #{tpu_custom_call.1} parent=63 // pred_fallthru
          _
        // Predicated region
        $region81: #{tpu_custom_call.1} parent=63 // pred_check
          %p484 = pneg %p169
        $region82: #{tpu_custom_call.1} parent=63 // pred_check_branch
          %486 = sbr.rel (%p484) target = $region84
        $region83: #{tpu_custom_call.1} parent=63 // pred_region
          %487 = dma.done [#allocation9], 512
        $region84: #{tpu_custom_call.1} parent=63 // pred_fallthru
          _
        // Predicated region
        $region85: #{tpu_custom_call.1} parent=63 // pred_check
          %p488 = pneg %p211
        $region86: #{tpu_custom_call.1} parent=63 // pred_check_branch
          %490 = sbr.rel (%p488) target = $region88
        $region87: #{tpu_custom_call.1} parent=63 // pred_region
          %491 = dma.done [#allocation12], 512
        $region88: #{tpu_custom_call.1} parent=63 // pred_fallthru
          _
        // Predicated region
        $region89: #{tpu_custom_call.1} parent=63 // pred_check
          %p492 = pneg %p253
        $region90: #{tpu_custom_call.1} parent=63 // pred_check_branch
          %494 = sbr.rel (%p492) target = $region92
        $region91: #{tpu_custom_call.1} parent=63 // pred_region
          %495 = dma.done [#allocation12], 512
        $region92: #{tpu_custom_call.1} parent=63 // pred_fallthru
          _
        %s496 = sand.u32 %s41, 1
        %s497 = scalar_lea.sflag [#allocation3], %s496
        %s498 = sand.u32 %s41, 1
        %s499 = smul.addr %s498, 8
        %s500 = scalar_lea.vmem [#allocation2], %s499
        %p501 = pneg %p54
        %p502 = pneg %p51
        %s503 = sand.u32 %s33, 1
        %s504 = scalar_lea.sflag [#allocation6], %s503
        %s505 = sand.u32 %s67, 1
        %s506 = smul.addr %s505, 8
        %s507 = scalar_lea.vmem [#allocation5], %s506
        %p508 = pneg %p80
        %p509 = pneg %p77
        %s510 = sand.u32 %s33, 1
        %s511 = scalar_lea.sflag [#allocation6], %s510
        %s512 = sand.u32 %s93, 1
        %s513 = smul.addr %s512, 8
        %s514 = scalar_lea.vmem [#allocation7], %s513
        %p515 = pneg %p106
        %p516 = pneg %p103
        %p517 = pneg %p127
        %p518 = pneg %p124
        %p519 = pneg %p148
        %p520 = pneg %p145
        %p521 = pneg %p169
        %p522 = pneg %p166
        %p523 = pneg %p190
        %p524 = pneg %p187
        %p525 = pneg %p211
        %p526 = pneg %p208
        %p527 = pneg %p232
        %p528 = pneg %p229
        %p529 = pneg %p253
        %p530 = pneg %p250
        %p531 = pneg %p274
        %p532 = pneg %p271
        %p533 = pneg %p300
        %p534 = pneg %p297
        %s535 = sand.u32 %s287, 1
        %s536 = scalar_lea.sflag [#allocation4], %s535
        %s537 = sand.u32 %s287, 1
        %s538 = smul.addr %s537, 16
        %s539 = scalar_lea.vmem [#allocation14], %s538
        %v541 = vld [vmem:[%s457] sm:$0xf]
        %v542 = vld [vmem:[%s457 + $0x4] sm:$0xf]
        %v543 = vld [vmem:[%s466] sm:$0xf]
        %v544 = vld [vmem:[%s466 + $0x4] sm:$0xf]
        %v545 = vld [vmem:[%s475] sm:$0xf]
        %v546 = vld [vmem:[%s475 + $0x4] sm:$0xf]
        %v547 = vld [vmem:[#allocation8] sm:$0xf]
        %v548 = vld [vmem:[#allocation8 + $0x4] sm:$0xf]
        %v549 = vld [vmem:[#allocation8 + $0x8] sm:$0xf]
        %v550 = vld [vmem:[#allocation8 + $0xc] sm:$0xf]
        %v551 = vld [vmem:[#allocation8 + $0x10] sm:$0xf]
        %v552 = vld [vmem:[#allocation8 + $0x14] sm:$0xf]
        %v553 = vld [vmem:[#allocation8 + $0x18] sm:$0xf]
        %v554 = vld [vmem:[#allocation8 + $0x1c] sm:$0xf]
        %v555 = vld [vmem:[%s4] sm:$0x1]
        %v557 = vlaneseq
        %v558 = vshrl.u32 %v557, 7
        %v559 = vsub.s32 0, %v558
        %v560 = vrot.slane %v555, %v559
        %v564 = vunpack.c.l.b16 %v541
        %v565 = vunpack.c.l.b16 %v542
        %v566 = vpack.c.b16 %v565, %v564
        %v575 = vunpack.c.l.b16 %v547
        %v576 = vunpack.c.l.b16 %v548
        %v577 = vunpack.c.l.b16 %v549
        %v578 = vunpack.c.l.b16 %v550
        %v579 = vunpack.c.l.b16 %v551
        %v580 = vunpack.c.l.b16 %v552
        %v581 = vunpack.c.l.b16 %v553
        %v582 = vunpack.c.l.b16 %v554
        %v583 = vpack.c.b16 %v576, %v575
        %v584 = vpack.c.b16 %v578, %v577
        %v585 = vpack.c.b16 %v580, %v579
        %v586 = vpack.c.b16 %v582, %v581
        %vm591 = vcmask 523264
        %v593 = vsel %vm591, %v566, 0
        %595 = vmatprep.subr.bf16.mxu0 0
        %596 = vmatpush1.bf16.msra.mxu0 0
        %597 = vmatprep.subr.bf16.mxu0 0
        %598 = vmatpush1.bf16.msra.mxu0 0
        %599 = vmatprep.subr.bf16.mxu0 0
        %600 = vmatpush1.bf16.msra.mxu0 0
        %601 = vmatprep.subr.bf16.mxu0 0
        %602 = vmatpush1.bf16.msra.mxu0 0
        %603 = vmatprep.subr.bf16.mxu0 0
        %604 = vmatpush1.bf16.msra.mxu0 %v586
        %605 = vmatprep.subr.bf16.mxu0 0
        %606 = vmatpush1.bf16.msra.mxu0 %v585
        %607 = vmatprep.subr.bf16.mxu0 0
        %608 = vmatpush1.bf16.msra.mxu0 %v584
        %609 = vmatprep.subr.bf16.mxu0 0
        %610 = vmatpush1.bf16.msra.mxu0 %v583
        %611 = vmatprep.subr.bf16.mxu0 0
        %612 = vmatpush2.bf16.msra.mxu0 0
        %613 = vmatprep.subr.bf16.mxu0 0
        %614 = vmatpush2.bf16.msra.mxu0 0
        %615 = vmatprep.subr.bf16.mxu0 0
        %616 = vmatpush2.bf16.msra.mxu0 0
        %617 = vmatprep.subr.bf16.mxu0 0
        %618 = vmatpush2.bf16.msra.mxu0 0
        %619 = vmatprep.subr.bf16.mxu0 0
        %620 = vmatpush2.bf16.msra.mxu0 0
        %621 = vmatprep.subr.bf16.mxu0 0
        %622 = vmatpush2.bf16.msra.mxu0 0
        %623 = vmatprep.subr.bf16.mxu0 0
        %624 = vmatpush2.bf16.msra.mxu0 0
        %625 = vmatprep.subr.bf16.mxu0 0
        %626 = vmatpush2.bf16.msra.mxu0 0
        %627 = vmatprep.mubr.bf16.mxu0 0
        %628 = vmatmul.mubr.bf16.gmra.mxu0 %v593
        %v629 = vpop.f32.mrf.mxu0
        %v630 = vadd.f32 %v560, %v629
        %v631 = vpop.f32.mrf.mxu0
        %v632 = vpop.f32.mrf.mxu0
        %v633 = vadd.f32 %v560, %v632
        %v634 = vpop.f32.mrf.mxu0
        %635 = vdwg.mxu0
        %v636 = vld [vmem:[#allocation10] sm:$0xf]
        %v637 = vld [vmem:[#allocation10 + $0x4] sm:$0xf]
        %v638 = vld [vmem:[#allocation10 + $0x8] sm:$0xf]
        %v639 = vld [vmem:[#allocation10 + $0xc] sm:$0xf]
        %v640 = vld [vmem:[#allocation10 + $0x10] sm:$0xf]
        %v641 = vld [vmem:[#allocation10 + $0x14] sm:$0xf]
        %v642 = vld [vmem:[#allocation10 + $0x18] sm:$0xf]
        %v643 = vld [vmem:[#allocation10 + $0x1c] sm:$0xf]
        %v644 = vld [vmem:[%s6] sm:$0x1]
        %v646 = vlaneseq
        %v647 = vshrl.u32 %v646, 7
        %v648 = vsub.s32 0, %v647
        %v649 = vrot.slane %v644, %v648
        %v653 = vunpack.c.l.b16 %v543
        %v654 = vunpack.c.l.b16 %v544
        %v655 = vpack.c.b16 %v654, %v653
        %v664 = vunpack.c.l.b16 %v636
        %v665 = vunpack.c.l.b16 %v637
        %v666 = vunpack.c.l.b16 %v638
        %v667 = vunpack.c.l.b16 %v639
        %v668 = vunpack.c.l.b16 %v640
        %v669 = vunpack.c.l.b16 %v641
        %v670 = vunpack.c.l.b16 %v642
        %v671 = vunpack.c.l.b16 %v643
        %v672 = vpack.c.b16 %v665, %v664
        %v673 = vpack.c.b16 %v667, %v666
        %v674 = vpack.c.b16 %v669, %v668
        %v675 = vpack.c.b16 %v671, %v670
        %v681 = vsel %vm591, %v655, 0
        %683 = vmatprep.subr.bf16.mxu0 0
        %684 = vmatpush1.bf16.msra.mxu0 0
        %685 = vmatprep.subr.bf16.mxu0 0
        %686 = vmatpush1.bf16.msra.mxu0 0
        %687 = vmatprep.subr.bf16.mxu0 0
        %688 = vmatpush1.bf16.msra.mxu0 0
        %689 = vmatprep.subr.bf16.mxu0 0
        %690 = vmatpush1.bf16.msra.mxu0 0
        %691 = vmatprep.subr.bf16.mxu0 0
        %692 = vmatpush1.bf16.msra.mxu0 %v675
        %693 = vmatprep.subr.bf16.mxu0 0
        %694 = vmatpush1.bf16.msra.mxu0 %v674
        %695 = vmatprep.subr.bf16.mxu0 0
        %696 = vmatpush1.bf16.msra.mxu0 %v673
        %697 = vmatprep.subr.bf16.mxu0 0
        %698 = vmatpush1.bf16.msra.mxu0 %v672
        %699 = vmatprep.subr.bf16.mxu0 0
        %700 = vmatpush2.bf16.msra.mxu0 0
        %701 = vmatprep.subr.bf16.mxu0 0
        %702 = vmatpush2.bf16.msra.mxu0 0
        %703 = vmatprep.subr.bf16.mxu0 0
        %704 = vmatpush2.bf16.msra.mxu0 0
        %705 = vmatprep.subr.bf16.mxu0 0
        %706 = vmatpush2.bf16.msra.mxu0 0
        %707 = vmatprep.subr.bf16.mxu0 0
        %708 = vmatpush2.bf16.msra.mxu0 0
        %709 = vmatprep.subr.bf16.mxu0 0
        %710 = vmatpush2.bf16.msra.mxu0 0
        %711 = vmatprep.subr.bf16.mxu0 0
        %712 = vmatpush2.bf16.msra.mxu0 0
        %713 = vmatprep.subr.bf16.mxu0 0
        %714 = vmatpush2.bf16.msra.mxu0 0
        %715 = vmatprep.mubr.bf16.mxu0 0
        %716 = vmatmul.mubr.bf16.gmra.mxu0 %v681
        %v717 = vpop.f32.mrf.mxu0
        %v718 = vadd.f32 %v649, %v717
        %v719 = vpop.f32.mrf.mxu0
        %v720 = vpop.f32.mrf.mxu0
        %v721 = vadd.f32 %v649, %v720
        %v722 = vpop.f32.mrf.mxu0
        %723 = vdwg.mxu0
        %v724 = vld [vmem:[#allocation11] sm:$0xf]
        %v725 = vld [vmem:[#allocation11 + $0x4] sm:$0xf]
        %v726 = vld [vmem:[#allocation11 + $0x8] sm:$0xf]
        %v727 = vld [vmem:[#allocation11 + $0xc] sm:$0xf]
        %v728 = vld [vmem:[#allocation11 + $0x10] sm:$0xf]
        %v729 = vld [vmem:[#allocation11 + $0x14] sm:$0xf]
        %v730 = vld [vmem:[#allocation11 + $0x18] sm:$0xf]
        %v731 = vld [vmem:[#allocation11 + $0x1c] sm:$0xf]
        %v732 = vld [vmem:[%s8] sm:$0x1]
        %v734 = vlaneseq
        %v735 = vshrl.u32 %v734, 7
        %v736 = vsub.s32 0, %v735
        %v737 = vrot.slane %v732, %v736
        %v741 = vunpack.c.l.b16 %v545
        %v742 = vunpack.c.l.b16 %v546
        %v743 = vpack.c.b16 %v742, %v741
        %v752 = vunpack.c.l.b16 %v724
        %v753 = vunpack.c.l.b16 %v725
        %v754 = vunpack.c.l.b16 %v726
        %v755 = vunpack.c.l.b16 %v727
        %v756 = vunpack.c.l.b16 %v728
        %v757 = vunpack.c.l.b16 %v729
        %v758 = vunpack.c.l.b16 %v730
        %v759 = vunpack.c.l.b16 %v731
        %v760 = vpack.c.b16 %v753, %v752
        %v761 = vpack.c.b16 %v755, %v754
        %v762 = vpack.c.b16 %v757, %v756
        %v763 = vpack.c.b16 %v759, %v758
        %v769 = vsel %vm591, %v743, 0
        %771 = vmatprep.subr.bf16.mxu0 0
        %772 = vmatpush1.bf16.msra.mxu0 0
        %773 = vmatprep.subr.bf16.mxu0 0
        %774 = vmatpush1.bf16.msra.mxu0 0
        %775 = vmatprep.subr.bf16.mxu0 0
        %776 = vmatpush1.bf16.msra.mxu0 0
        %777 = vmatprep.subr.bf16.mxu0 0
        %778 = vmatpush1.bf16.msra.mxu0 0
        %779 = vmatprep.subr.bf16.mxu0 0
        %780 = vmatpush1.bf16.msra.mxu0 %v763
        %781 = vmatprep.subr.bf16.mxu0 0
        %782 = vmatpush1.bf16.msra.mxu0 %v762
        %783 = vmatprep.subr.bf16.mxu0 0
        %784 = vmatpush1.bf16.msra.mxu0 %v761
        %785 = vmatprep.subr.bf16.mxu0 0
        %786 = vmatpush1.bf16.msra.mxu0 %v760
        %787 = vmatprep.subr.bf16.mxu0 0
        %788 = vmatpush2.bf16.msra.mxu0 0
        %789 = vmatprep.subr.bf16.mxu0 0
        %790 = vmatpush2.bf16.msra.mxu0 0
        %791 = vmatprep.subr.bf16.mxu0 0
        %792 = vmatpush2.bf16.msra.mxu0 0
        %793 = vmatprep.subr.bf16.mxu0 0
        %794 = vmatpush2.bf16.msra.mxu0 0
        %795 = vmatprep.subr.bf16.mxu0 0
        %796 = vmatpush2.bf16.msra.mxu0 0
        %797 = vmatprep.subr.bf16.mxu0 0
        %798 = vmatpush2.bf16.msra.mxu0 0
        %799 = vmatprep.subr.bf16.mxu0 0
        %800 = vmatpush2.bf16.msra.mxu0 0
        %801 = vmatprep.subr.bf16.mxu0 0
        %802 = vmatpush2.bf16.msra.mxu0 0
        %803 = vmatprep.mubr.bf16.mxu0 0
        %804 = vmatmul.mubr.bf16.gmra.mxu0 %v769
        %v805 = vpop.f32.mrf.mxu0
        %v806 = vadd.f32 %v737, %v805
        %v807 = vpop.f32.mrf.mxu0
        %v808 = vpop.f32.mrf.mxu0
        %v809 = vadd.f32 %v737, %v808
        %v810 = vpop.f32.mrf.mxu0
        %811 = vdwg.mxu0
        %v812 = vpack.c.bf16 %v633, %v630
        %v813 = vpack.c.bf16 %v721, %v718
        %v814 = vpack.c.bf16 %v809, %v806
        %vm815 = vcmask 130048
        %v817 = vsel %vm815, %v812, 0
        %v820 = vsel %vm815, %v813, 0
        %822 = vmatprep.subr.bf16.mxu0 0
        %823 = vmatpush1.bf16.xpose.msra.mxu0 0
        %824 = vmatprep.subr.bf16.mxu0 0
        %825 = vmatpush1.bf16.xpose.msra.mxu0 0
        %826 = vmatprep.subr.bf16.mxu0 0
        %827 = vmatpush1.bf16.xpose.msra.mxu0 0
        %828 = vmatprep.subr.bf16.mxu0 0
        %829 = vmatpush1.bf16.xpose.msra.mxu0 0
        %830 = vmatprep.subr.bf16.mxu0 0
        %831 = vmatpush1.bf16.xpose.msra.mxu0 0
        %832 = vmatprep.subr.bf16.mxu0 0
        %833 = vmatpush1.bf16.xpose.msra.mxu0 0
        %834 = vmatprep.subr.bf16.mxu0 0
        %835 = vmatpush1.bf16.xpose.msra.mxu0 0
        %836 = vmatprep.subr.bf16.mxu0 0
        %837 = vmatpush1.bf16.xpose.msra.mxu0 %v820
        %838 = vmatprep.subr.bf16.mxu0 0
        %839 = vmatpush2.bf16.xpose.msra.mxu0 0
        %840 = vmatprep.subr.bf16.mxu0 0
        %841 = vmatpush2.bf16.xpose.msra.mxu0 0
        %842 = vmatprep.subr.bf16.mxu0 0
        %843 = vmatpush2.bf16.xpose.msra.mxu0 0
        %844 = vmatprep.subr.bf16.mxu0 0
        %845 = vmatpush2.bf16.xpose.msra.mxu0 0
        %846 = vmatprep.subr.bf16.mxu0 0
        %847 = vmatpush2.bf16.xpose.msra.mxu0 0
        %848 = vmatprep.subr.bf16.mxu0 0
        %849 = vmatpush2.bf16.xpose.msra.mxu0 0
        %850 = vmatprep.subr.bf16.mxu0 0
        %851 = vmatpush2.bf16.xpose.msra.mxu0 0
        %852 = vmatprep.subr.bf16.mxu0 0
        %853 = vmatpush2.bf16.xpose.msra.mxu0 0
        %854 = vmatprep.mubr.bf16.mxu0 0
        %855 = vmatmul.mubr.bf16.gmra.mxu0 %v817
        %v856 = vpop.f32.mrf.mxu0
        %v857 = vadd.f32 0.0, %v856
        %v858 = vpop.f32.mrf.mxu0
        %v859 = vpop.f32.mrf.mxu0
        %v860 = vadd.f32 0.0, %v859
        %v861 = vpop.f32.mrf.mxu0
        %862 = vdwg.mxu0
        %v863 = vsel %vm815, %v857, -inf
        %864 = vmax.xlane.f32.xlu0 %v863
        %v865 = vpop.xlane.xlu0 %864
        %v866 = vsel %vm815, %v860, -inf
        %867 = vmax.xlane.f32.xlu0 %v866
        %v868 = vpop.xlane.xlu0 %867
        %v869 = vsub.f32 %v857, %v865
        %v870 = vsub.f32 %v860, %v868
        %v871 = vmul.f32 %v869, 1.442695
        %v872 = vpow.pop %v871
        %v873 = vmul.f32 %v870, 1.442695
        %v874 = vpow.pop %v873
        %v875 = vsel %vm815, %v872, 0.0
        %876 = vadd.xlane.f32.xlu0 %v875
        %v877 = vpop.xlane.xlu0 %876
        %v878 = vsel %vm815, %v874, 0.0
        %879 = vadd.xlane.f32.xlu0 %v878
        %v880 = vpop.xlane.xlu0 %879
        %v881 = vrcp.pop %v877
        %v882 = vrcp.pop %v880
        %v883 = vmul.f32 %v872, %v881
        %v884 = vmul.f32 %v874, %v882
        %v885 = vpack.c.bf16 %v884, %v883
        %v887 = vsel %vm815, %v885, 0
        %889 = vmatprep.subr.bf16.mxu0 0
        %890 = vmatpush1.bf16.msra.mxu0 0
        %891 = vmatprep.subr.bf16.mxu0 0
        %892 = vmatpush1.bf16.msra.mxu0 0
        %893 = vmatprep.subr.bf16.mxu0 0
        %894 = vmatpush1.bf16.msra.mxu0 0
        %895 = vmatprep.subr.bf16.mxu0 0
        %896 = vmatpush1.bf16.msra.mxu0 0
        %897 = vmatprep.subr.bf16.mxu0 0
        %898 = vmatpush1.bf16.msra.mxu0 0
        %899 = vmatprep.subr.bf16.mxu0 0
        %900 = vmatpush1.bf16.msra.mxu0 0
        %901 = vmatprep.subr.bf16.mxu0 0
        %902 = vmatpush1.bf16.msra.mxu0 0
        %903 = vmatprep.subr.bf16.mxu0 0
        %904 = vmatpush1.bf16.msra.mxu0 %v814
        %905 = vmatprep.subr.bf16.mxu0 0
        %906 = vmatpush2.bf16.msra.mxu0 0
        %907 = vmatprep.subr.bf16.mxu0 0
        %908 = vmatpush2.bf16.msra.mxu0 0
        %909 = vmatprep.subr.bf16.mxu0 0
        %910 = vmatpush2.bf16.msra.mxu0 0
        %911 = vmatprep.subr.bf16.mxu0 0
        %912 = vmatpush2.bf16.msra.mxu0 0
        %913 = vmatprep.subr.bf16.mxu0 0
        %914 = vmatpush2.bf16.msra.mxu0 0
        %915 = vmatprep.subr.bf16.mxu0 0
        %916 = vmatpush2.bf16.msra.mxu0 0
        %917 = vmatprep.subr.bf16.mxu0 0
        %918 = vmatpush2.bf16.msra.mxu0 0
        %919 = vmatprep.subr.bf16.mxu0 0
        %920 = vmatpush2.bf16.msra.mxu0 0
        %921 = vmatprep.mubr.bf16.mxu0 0
        %922 = vmatmul.mubr.bf16.gmra.mxu0 %v887
        %v923 = vpop.f32.mrf.mxu0
        %v924 = vadd.f32 0.0, %v923
        %v925 = vpop.f32.mrf.mxu0
        %v926 = vpop.f32.mrf.mxu0
        %v927 = vadd.f32 0.0, %v926
        %v928 = vpop.f32.mrf.mxu0
        %929 = vdwg.mxu0
        %931 = vrot.lane.b32.xlu0 %v812, 112
        %v932 = vpop.permute.xlu0 %931
        %934 = vrot.lane.b32.xlu0 %v813, 112
        %v935 = vpop.permute.xlu0 %934
        %v937 = vsel %vm815, %v932, 0
        %v940 = vsel %vm815, %v935, 0
        %942 = vmatprep.subr.bf16.mxu0 0
        %943 = vmatpush1.bf16.xpose.msra.mxu0 0
        %944 = vmatprep.subr.bf16.mxu0 0
        %945 = vmatpush1.bf16.xpose.msra.mxu0 0
        %946 = vmatprep.subr.bf16.mxu0 0
        %947 = vmatpush1.bf16.xpose.msra.mxu0 0
        %948 = vmatprep.subr.bf16.mxu0 0
        %949 = vmatpush1.bf16.xpose.msra.mxu0 0
        %950 = vmatprep.subr.bf16.mxu0 0
        %951 = vmatpush1.bf16.xpose.msra.mxu0 0
        %952 = vmatprep.subr.bf16.mxu0 0
        %953 = vmatpush1.bf16.xpose.msra.mxu0 0
        %954 = vmatprep.subr.bf16.mxu0 0
        %955 = vmatpush1.bf16.xpose.msra.mxu0 0
        %956 = vmatprep.subr.bf16.mxu0 0
        %957 = vmatpush1.bf16.xpose.msra.mxu0 %v940
        %958 = vmatprep.subr.bf16.mxu0 0
        %959 = vmatpush2.bf16.xpose.msra.mxu0 0
        %960 = vmatprep.subr.bf16.mxu0 0
        %961 = vmatpush2.bf16.xpose.msra.mxu0 0
        %962 = vmatprep.subr.bf16.mxu0 0
        %963 = vmatpush2.bf16.xpose.msra.mxu0 0
        %964 = vmatprep.subr.bf16.mxu0 0
        %965 = vmatpush2.bf16.xpose.msra.mxu0 0
        %966 = vmatprep.subr.bf16.mxu0 0
        %967 = vmatpush2.bf16.xpose.msra.mxu0 0
        %968 = vmatprep.subr.bf16.mxu0 0
        %969 = vmatpush2.bf16.xpose.msra.mxu0 0
        %970 = vmatprep.subr.bf16.mxu0 0
        %971 = vmatpush2.bf16.xpose.msra.mxu0 0
        %972 = vmatprep.subr.bf16.mxu0 0
        %973 = vmatpush2.bf16.xpose.msra.mxu0 0
        %974 = vmatprep.mubr.bf16.mxu0 0
        %975 = vmatmul.mubr.bf16.gmra.mxu0 %v937
        %v976 = vpop.f32.mrf.mxu0
        %v977 = vadd.f32 0.0, %v976
        %v978 = vpop.f32.mrf.mxu0
        %v979 = vpop.f32.mrf.mxu0
        %v980 = vadd.f32 0.0, %v979
        %v981 = vpop.f32.mrf.mxu0
        %982 = vdwg.mxu0
        %v983 = vsel %vm815, %v977, -inf
        %984 = vmax.xlane.f32.xlu0 %v983
        %v985 = vpop.xlane.xlu0 %984
        %v986 = vsel %vm815, %v980, -inf
        %987 = vmax.xlane.f32.xlu0 %v986
        %v988 = vpop.xlane.xlu0 %987
        %v989 = vsub.f32 %v977, %v985
        %v990 = vsub.f32 %v980, %v988
        %v991 = vmul.f32 %v989, 1.442695
        %v992 = vpow.pop %v991
        %v993 = vmul.f32 %v990, 1.442695
        %v994 = vpow.pop %v993
        %v995 = vsel %vm815, %v992, 0.0
        %996 = vadd.xlane.f32.xlu0 %v995
        %v997 = vpop.xlane.xlu0 %996
        %v998 = vsel %vm815, %v994, 0.0
        %999 = vadd.xlane.f32.xlu0 %v998
        %v1000 = vpop.xlane.xlu0 %999
        %v1001 = vrcp.pop %v997
        %v1002 = vrcp.pop %v1000
        %v1003 = vmul.f32 %v992, %v1001
        %v1004 = vmul.f32 %v994, %v1002
        %v1005 = vpack.c.bf16 %v1004, %v1003
        %1007 = vrot.lane.b32.xlu0 %v814, 112
        %v1008 = vpop.permute.xlu0 %1007
        %v1011 = vsel %vm815, %v1005, 0
        %1013 = vmatprep.subr.bf16.mxu0 0
        %1014 = vmatpush1.bf16.msra.mxu0 0
        %1015 = vmatprep.subr.bf16.mxu0 0
        %1016 = vmatpush1.bf16.msra.mxu0 0
        %1017 = vmatprep.subr.bf16.mxu0 0
        %1018 = vmatpush1.bf16.msra.mxu0 0
        %1019 = vmatprep.subr.bf16.mxu0 0
        %1020 = vmatpush1.bf16.msra.mxu0 0
        %1021 = vmatprep.subr.bf16.mxu0 0
        %1022 = vmatpush1.bf16.msra.mxu0 0
        %1023 = vmatprep.subr.bf16.mxu0 0
        %1024 = vmatpush1.bf16.msra.mxu0 0
        %1025 = vmatprep.subr.bf16.mxu0 0
        %1026 = vmatpush1.bf16.msra.mxu0 0
        %1027 = vmatprep.subr.bf16.mxu0 0
        %1028 = vmatpush1.bf16.msra.mxu0 %v1008
        %1029 = vmatprep.subr.bf16.mxu0 0
        %1030 = vmatpush2.bf16.msra.mxu0 0
        %1031 = vmatprep.subr.bf16.mxu0 0
        %1032 = vmatpush2.bf16.msra.mxu0 0
        %1033 = vmatprep.subr.bf16.mxu0 0
        %1034 = vmatpush2.bf16.msra.mxu0 0
        %1035 = vmatprep.subr.bf16.mxu0 0
        %1036 = vmatpush2.bf16.msra.mxu0 0
        %1037 = vmatprep.subr.bf16.mxu0 0
        %1038 = vmatpush2.bf16.msra.mxu0 0
        %1039 = vmatprep.subr.bf16.mxu0 0
        %1040 = vmatpush2.bf16.msra.mxu0 0
        %1041 = vmatprep.subr.bf16.mxu0 0
        %1042 = vmatpush2.bf16.msra.mxu0 0
        %1043 = vmatprep.subr.bf16.mxu0 0
        %1044 = vmatpush2.bf16.msra.mxu0 0
        %1045 = vmatprep.mubr.bf16.mxu0 0
        %1046 = vmatmul.mubr.bf16.gmra.mxu0 %v1011
        %v1047 = vpop.f32.mrf.mxu0
        %v1048 = vadd.f32 0.0, %v1047
        %v1049 = vpop.f32.mrf.mxu0
        %v1050 = vpop.f32.mrf.mxu0
        %v1051 = vadd.f32 0.0, %v1050
        %v1052 = vpop.f32.mrf.mxu0
        %1053 = vdwg.mxu0
        %1054 = vrot.lane.b32.xlu0 %v812, 96
        %v1055 = vpop.permute.xlu0 %1054
        %1056 = vrot.lane.b32.xlu0 %v813, 96
        %v1057 = vpop.permute.xlu0 %1056
        %v1059 = vsel %vm815, %v1055, 0
        %v1062 = vsel %vm815, %v1057, 0
        %1064 = vmatprep.subr.bf16.mxu0 0
        %1065 = vmatpush1.bf16.xpose.msra.mxu0 0
        %1066 = vmatprep.subr.bf16.mxu0 0
        %1067 = vmatpush1.bf16.xpose.msra.mxu0 0
        %1068 = vmatprep.subr.bf16.mxu0 0
        %1069 = vmatpush1.bf16.xpose.msra.mxu0 0
        %1070 = vmatprep.subr.bf16.mxu0 0
        %1071 = vmatpush1.bf16.xpose.msra.mxu0 0
        %1072 = vmatprep.subr.bf16.mxu0 0
        %1073 = vmatpush1.bf16.xpose.msra.mxu0 0
        %1074 = vmatprep.subr.bf16.mxu0 0
        %1075 = vmatpush1.bf16.xpose.msra.mxu0 0
        %1076 = vmatprep.subr.bf16.mxu0 0
        %1077 = vmatpush1.bf16.xpose.msra.mxu0 0
        %1078 = vmatprep.subr.bf16.mxu0 0
        %1079 = vmatpush1.bf16.xpose.msra.mxu0 %v1062
        %1080 = vmatprep.subr.bf16.mxu0 0
        %1081 = vmatpush2.bf16.xpose.msra.mxu0 0
        %1082 = vmatprep.subr.bf16.mxu0 0
        %1083 = vmatpush2.bf16.xpose.msra.mxu0 0
        %1084 = vmatprep.subr.bf16.mxu0 0
        %1085 = vmatpush2.bf16.xpose.msra.mxu0 0
        %1086 = vmatprep.subr.bf16.mxu0 0
        %1087 = vmatpush2.bf16.xpose.msra.mxu0 0
        %1088 = vmatprep.subr.bf16.mxu0 0
        %1089 = vmatpush2.bf16.xpose.msra.mxu0 0
        %1090 = vmatprep.subr.bf16.mxu0 0
        %1091 = vmatpush2.bf16.xpose.msra.mxu0 0
        %1092 = vmatprep.subr.bf16.mxu0 0
        %1093 = vmatpush2.bf16.xpose.msra.mxu0 0
        %1094 = vmatprep.subr.bf16.mxu0 0
        %1095 = vmatpush2.bf16.xpose.msra.mxu0 0
        %1096 = vmatprep.mubr.bf16.mxu0 0
        %1097 = vmatmul.mubr.bf16.gmra.mxu0 %v1059
        %v1098 = vpop.f32.mrf.mxu0
        %v1099 = vadd.f32 0.0, %v1098
        %v1100 = vpop.f32.mrf.mxu0
        %v1101 = vpop.f32.mrf.mxu0
        %v1102 = vadd.f32 0.0, %v1101
        %v1103 = vpop.f32.mrf.mxu0
        %1104 = vdwg.mxu0
        %v1105 = vsel %vm815, %v1099, -inf
        %1106 = vmax.xlane.f32.xlu0 %v1105
        %v1107 = vpop.xlane.xlu0 %1106
        %v1108 = vsel %vm815, %v1102, -inf
        %1109 = vmax.xlane.f32.xlu0 %v1108
        %v1110 = vpop.xlane.xlu0 %1109
        %v1111 = vsub.f32 %v1099, %v1107
        %v1112 = vsub.f32 %v1102, %v1110
        %v1113 = vmul.f32 %v1111, 1.442695
        %v1114 = vpow.pop %v1113
        %v1115 = vmul.f32 %v1112, 1.442695
        %v1116 = vpow.pop %v1115
        %v1117 = vsel %vm815, %v1114, 0.0
        %1118 = vadd.xlane.f32.xlu0 %v1117
        %v1119 = vpop.xlane.xlu0 %1118
        %v1120 = vsel %vm815, %v1116, 0.0
        %1121 = vadd.xlane.f32.xlu0 %v1120
        %v1122 = vpop.xlane.xlu0 %1121
        %v1123 = vrcp.pop %v1119
        %v1124 = vrcp.pop %v1122
        %v1125 = vmul.f32 %v1114, %v1123
        %v1126 = vmul.f32 %v1116, %v1124
        %v1127 = vpack.c.bf16 %v1126, %v1125
        %1128 = vrot.lane.b32.xlu0 %v814, 96
        %v1129 = vpop.permute.xlu0 %1128
        %v1132 = vsel %vm815, %v1127, 0
        %1134 = vmatprep.subr.bf16.mxu0 0
        %1135 = vmatpush1.bf16.msra.mxu0 0
        %1136 = vmatprep.subr.bf16.mxu0 0
        %1137 = vmatpush1.bf16.msra.mxu0 0
        %1138 = vmatprep.subr.bf16.mxu0 0
        %1139 = vmatpush1.bf16.msra.mxu0 0
        %1140 = vmatprep.subr.bf16.mxu0 0
        %1141 = vmatpush1.bf16.msra.mxu0 0
        %1142 = vmatprep.subr.bf16.mxu0 0
        %1143 = vmatpush1.bf16.msra.mxu0 0
        %1144 = vmatprep.subr.bf16.mxu0 0
        %1145 = vmatpush1.bf16.msra.mxu0 0
        %1146 = vmatprep.subr.bf16.mxu0 0
        %1147 = vmatpush1.bf16.msra.mxu0 0
        %1148 = vmatprep.subr.bf16.mxu0 0
        %1149 = vmatpush1.bf16.msra.mxu0 %v1129
        %1150 = vmatprep.subr.bf16.mxu0 0
        %1151 = vmatpush2.bf16.msra.mxu0 0
        %1152 = vmatprep.subr.bf16.mxu0 0
        %1153 = vmatpush2.bf16.msra.mxu0 0
        %1154 = vmatprep.subr.bf16.mxu0 0
        %1155 = vmatpush2.bf16.msra.mxu0 0
        %1156 = vmatprep.subr.bf16.mxu0 0
        %1157 = vmatpush2.bf16.msra.mxu0 0
        %1158 = vmatprep.subr.bf16.mxu0 0
        %1159 = vmatpush2.bf16.msra.mxu0 0
        %1160 = vmatprep.subr.bf16.mxu0 0
        %1161 = vmatpush2.bf16.msra.mxu0 0
        %1162 = vmatprep.subr.bf16.mxu0 0
        %1163 = vmatpush2.bf16.msra.mxu0 0
        %1164 = vmatprep.subr.bf16.mxu0 0
        %1165 = vmatpush2.bf16.msra.mxu0 0
        %1166 = vmatprep.mubr.bf16.mxu0 0
        %1167 = vmatmul.mubr.bf16.gmra.mxu0 %v1132
        %v1168 = vpop.f32.mrf.mxu0
        %v1169 = vadd.f32 0.0, %v1168
        %v1170 = vpop.f32.mrf.mxu0
        %v1171 = vpop.f32.mrf.mxu0
        %v1172 = vadd.f32 0.0, %v1171
        %v1173 = vpop.f32.mrf.mxu0
        %1174 = vdwg.mxu0
        %1175 = vrot.lane.b32.xlu0 %v812, 80
        %v1176 = vpop.permute.xlu0 %1175
        %1177 = vrot.lane.b32.xlu0 %v813, 80
        %v1178 = vpop.permute.xlu0 %1177
        %v1180 = vsel %vm815, %v1176, 0
        %v1183 = vsel %vm815, %v1178, 0
        %1185 = vmatprep.subr.bf16.mxu0 0
        %1186 = vmatpush1.bf16.xpose.msra.mxu0 0
        %1187 = vmatprep.subr.bf16.mxu0 0
        %1188 = vmatpush1.bf16.xpose.msra.mxu0 0
        %1189 = vmatprep.subr.bf16.mxu0 0
        %1190 = vmatpush1.bf16.xpose.msra.mxu0 0
        %1191 = vmatprep.subr.bf16.mxu0 0
        %1192 = vmatpush1.bf16.xpose.msra.mxu0 0
        %1193 = vmatprep.subr.bf16.mxu0 0
        %1194 = vmatpush1.bf16.xpose.msra.mxu0 0
        %1195 = vmatprep.subr.bf16.mxu0 0
        %1196 = vmatpush1.bf16.xpose.msra.mxu0 0
        %1197 = vmatprep.subr.bf16.mxu0 0
        %1198 = vmatpush1.bf16.xpose.msra.mxu0 0
        %1199 = vmatprep.subr.bf16.mxu0 0
        %1200 = vmatpush1.bf16.xpose.msra.mxu0 %v1183
        %1201 = vmatprep.subr.bf16.mxu0 0
        %1202 = vmatpush2.bf16.xpose.msra.mxu0 0
        %1203 = vmatprep.subr.bf16.mxu0 0
        %1204 = vmatpush2.bf16.xpose.msra.mxu0 0
        %1205 = vmatprep.subr.bf16.mxu0 0
        %1206 = vmatpush2.bf16.xpose.msra.mxu0 0
        %1207 = vmatprep.subr.bf16.mxu0 0
        %1208 = vmatpush2.bf16.xpose.msra.mxu0 0
        %1209 = vmatprep.subr.bf16.mxu0 0
        %1210 = vmatpush2.bf16.xpose.msra.mxu0 0
        %1211 = vmatprep.subr.bf16.mxu0 0
        %1212 = vmatpush2.bf16.xpose.msra.mxu0 0
        %1213 = vmatprep.subr.bf16.mxu0 0
        %1214 = vmatpush2.bf16.xpose.msra.mxu0 0
        %1215 = vmatprep.subr.bf16.mxu0 0
        %1216 = vmatpush2.bf16.xpose.msra.mxu0 0
        %1217 = vmatprep.mubr.bf16.mxu0 0
        %1218 = vmatmul.mubr.bf16.gmra.mxu0 %v1180
        %v1219 = vpop.f32.mrf.mxu0
        %v1220 = vadd.f32 0.0, %v1219
        %v1221 = vpop.f32.mrf.mxu0
        %v1222 = vpop.f32.mrf.mxu0
        %v1223 = vadd.f32 0.0, %v1222
        %v1224 = vpop.f32.mrf.mxu0
        %1225 = vdwg.mxu0
        %v1226 = vsel %vm815, %v1220, -inf
        %1227 = vmax.xlane.f32.xlu0 %v1226
        %v1228 = vpop.xlane.xlu0 %1227
        %v1229 = vsel %vm815, %v1223, -inf
        %1230 = vmax.xlane.f32.xlu0 %v1229
        %v1231 = vpop.xlane.xlu0 %1230
        %v1232 = vsub.f32 %v1220, %v1228
        %v1233 = vsub.f32 %v1223, %v1231
        %v1234 = vmul.f32 %v1232, 1.442695
        %v1235 = vpow.pop %v1234
        %v1236 = vmul.f32 %v1233, 1.442695
        %v1237 = vpow.pop %v1236
        %v1238 = vsel %vm815, %v1235, 0.0
        %1239 = vadd.xlane.f32.xlu0 %v1238
        %v1240 = vpop.xlane.xlu0 %1239
        %v1241 = vsel %vm815, %v1237, 0.0
        %1242 = vadd.xlane.f32.xlu0 %v1241
        %v1243 = vpop.xlane.xlu0 %1242
        %v1244 = vrcp.pop %v1240
        %v1245 = vrcp.pop %v1243
        %v1246 = vmul.f32 %v1235, %v1244
        %v1247 = vmul.f32 %v1237, %v1245
        %v1248 = vpack.c.bf16 %v1247, %v1246
        %1249 = vrot.lane.b32.xlu0 %v814, 80
        %v1250 = vpop.permute.xlu0 %1249
        %v1253 = vsel %vm815, %v1248, 0
        %1255 = vmatprep.subr.bf16.mxu0 0
        %1256 = vmatpush1.bf16.msra.mxu0 0
        %1257 = vmatprep.subr.bf16.mxu0 0
        %1258 = vmatpush1.bf16.msra.mxu0 0
        %1259 = vmatprep.subr.bf16.mxu0 0
        %1260 = vmatpush1.bf16.msra.mxu0 0
        %1261 = vmatprep.subr.bf16.mxu0 0
        %1262 = vmatpush1.bf16.msra.mxu0 0
        %1263 = vmatprep.subr.bf16.mxu0 0
        %1264 = vmatpush1.bf16.msra.mxu0 0
        %1265 = vmatprep.subr.bf16.mxu0 0
        %1266 = vmatpush1.bf16.msra.mxu0 0
        %1267 = vmatprep.subr.bf16.mxu0 0
        %1268 = vmatpush1.bf16.msra.mxu0 0
        %1269 = vmatprep.subr.bf16.mxu0 0
        %1270 = vmatpush1.bf16.msra.mxu0 %v1250
        %1271 = vmatprep.subr.bf16.mxu0 0
        %1272 = vmatpush2.bf16.msra.mxu0 0
        %1273 = vmatprep.subr.bf16.mxu0 0
        %1274 = vmatpush2.bf16.msra.mxu0 0
        %1275 = vmatprep.subr.bf16.mxu0 0
        %1276 = vmatpush2.bf16.msra.mxu0 0
        %1277 = vmatprep.subr.bf16.mxu0 0
        %1278 = vmatpush2.bf16.msra.mxu0 0
        %1279 = vmatprep.subr.bf16.mxu0 0
        %1280 = vmatpush2.bf16.msra.mxu0 0
        %1281 = vmatprep.subr.bf16.mxu0 0
        %1282 = vmatpush2.bf16.msra.mxu0 0
        %1283 = vmatprep.subr.bf16.mxu0 0
        %1284 = vmatpush2.bf16.msra.mxu0 0
        %1285 = vmatprep.subr.bf16.mxu0 0
        %1286 = vmatpush2.bf16.msra.mxu0 0
        %1287 = vmatprep.mubr.bf16.mxu0 0
        %1288 = vmatmul.mubr.bf16.gmra.mxu0 %v1253
        %v1289 = vpop.f32.mrf.mxu0
        %v1290 = vadd.f32 0.0, %v1289
        %v1291 = vpop.f32.mrf.mxu0
        %v1292 = vpop.f32.mrf.mxu0
        %v1293 = vadd.f32 0.0, %v1292
        %v1294 = vpop.f32.mrf.mxu0
        %1295 = vdwg.mxu0
        %1298 = vrot.lane.b32.xlu0 %v1048, 16
        %v1299 = vpop.permute.xlu0 %1298
        %1300 = vrot.lane.b32.xlu0 %v1051, 16
        %v1301 = vpop.permute.xlu0 %1300
        %1306 = vrot.lane.b32.xlu0 %v1169, 32
        %v1307 = vpop.permute.xlu0 %1306
        %1308 = vrot.lane.b32.xlu0 %v1172, 32
        %v1309 = vpop.permute.xlu0 %1308
        %1314 = vrot.lane.b32.xlu0 %v1290, 48
        %v1315 = vpop.permute.xlu0 %1314
        %1316 = vrot.lane.b32.xlu0 %v1293, 48
        %v1317 = vpop.permute.xlu0 %1316
        %v1320 = vsel %vm815, %v924, %v1299
        %v1321 = vsel %vm815, %v927, %v1301
        %vm1322 = vcmask 261120
        %v1323 = vsel %vm1322, %v1320, %v1307
        %v1324 = vsel %vm1322, %v1321, %v1309
        %vm1325 = vcmask 392192
        %v1326 = vsel %vm1325, %v1323, %v1315
        %v1327 = vsel %vm1325, %v1324, %v1317
        %v1328 = vpack.c.bf16 %v1327, %v1326
        %v1329 = vld [vmem:[#allocation13] sm:$0xf]
        %v1330 = vld [vmem:[#allocation13 + $0x4] sm:$0xf]
        %v1331 = vld [vmem:[#allocation13 + $0x8] sm:$0xf]
        %v1332 = vld [vmem:[#allocation13 + $0xc] sm:$0xf]
        %v1333 = vld [vmem:[#allocation13 + $0x10] sm:$0xf]
        %v1334 = vld [vmem:[#allocation13 + $0x14] sm:$0xf]
        %v1335 = vld [vmem:[#allocation13 + $0x18] sm:$0xf]
        %v1336 = vld [vmem:[#allocation13 + $0x1c] sm:$0xf]
        %v1337 = vld [vmem:[%s10] sm:$0x1]
        %v1339 = vlaneseq
        %v1340 = vshrl.u32 %v1339, 7
        %v1341 = vsub.s32 0, %v1340
        %v1342 = vrot.slane %v1337, %v1341
        %v1352 = vunpack.c.l.b16 %v1329
        %v1353 = vunpack.c.l.b16 %v1330
        %v1354 = vunpack.c.l.b16 %v1331
        %v1355 = vunpack.c.l.b16 %v1332
        %v1356 = vunpack.c.l.b16 %v1333
        %v1357 = vunpack.c.l.b16 %v1334
        %v1358 = vunpack.c.l.b16 %v1335
        %v1359 = vunpack.c.l.b16 %v1336
        %v1360 = vpack.c.b16 %v1353, %v1352
        %v1361 = vpack.c.b16 %v1355, %v1354
        %v1362 = vpack.c.b16 %v1357, %v1356
        %v1363 = vpack.c.b16 %v1359, %v1358
        %v1369 = vsel %vm591, %v1328, 0
        %1371 = vmatprep.subr.bf16.mxu0 0
        %1372 = vmatpush1.bf16.msra.mxu0 0
        %1373 = vmatprep.subr.bf16.mxu0 0
        %1374 = vmatpush1.bf16.msra.mxu0 0
        %1375 = vmatprep.subr.bf16.mxu0 0
        %1376 = vmatpush1.bf16.msra.mxu0 0
        %1377 = vmatprep.subr.bf16.mxu0 0
        %1378 = vmatpush1.bf16.msra.mxu0 0
        %1379 = vmatprep.subr.bf16.mxu0 0
        %1380 = vmatpush1.bf16.msra.mxu0 %v1363
        %1381 = vmatprep.subr.bf16.mxu0 0
        %1382 = vmatpush1.bf16.msra.mxu0 %v1362
        %1383 = vmatprep.subr.bf16.mxu0 0
        %1384 = vmatpush1.bf16.msra.mxu0 %v1361
        %1385 = vmatprep.subr.bf16.mxu0 0
        %1386 = vmatpush1.bf16.msra.mxu0 %v1360
        %1387 = vmatprep.subr.bf16.mxu0 0
        %1388 = vmatpush2.bf16.msra.mxu0 0
        %1389 = vmatprep.subr.bf16.mxu0 0
        %1390 = vmatpush2.bf16.msra.mxu0 0
        %1391 = vmatprep.subr.bf16.mxu0 0
        %1392 = vmatpush2.bf16.msra.mxu0 0
        %1393 = vmatprep.subr.bf16.mxu0 0
        %1394 = vmatpush2.bf16.msra.mxu0 0
        %1395 = vmatprep.subr.bf16.mxu0 0
        %1396 = vmatpush2.bf16.msra.mxu0 0
        %1397 = vmatprep.subr.bf16.mxu0 0
        %1398 = vmatpush2.bf16.msra.mxu0 0
        %1399 = vmatprep.subr.bf16.mxu0 0
        %1400 = vmatpush2.bf16.msra.mxu0 0
        %1401 = vmatprep.subr.bf16.mxu0 0
        %1402 = vmatpush2.bf16.msra.mxu0 0
        %1403 = vmatprep.mubr.bf16.mxu0 0
        %1404 = vmatmul.mubr.bf16.gmra.mxu0 %v1369
        %v1405 = vpop.f32.mrf.mxu0
        %v1406 = vadd.f32 %v1342, %v1405
        %v1407 = vpop.f32.mrf.mxu0
        %v1408 = vpop.f32.mrf.mxu0
        %v1409 = vadd.f32 %v1342, %v1408
        %v1410 = vpop.f32.mrf.mxu0
        %1411 = vdwg.mxu0
        %1412 = vst [vmem:[%s539] sm:$0xff] %v1406
        %1413 = vst [vmem:[%s539 + $0x8] sm:$0xff] %v1409
        %s1414 = sand.u32 %s287, 1
        %s1415 = scalar_lea.sflag [#allocation4], %s1414
        %s1416 = sand.u32 %s287, 1
        %s1417 = smul.addr %s1416, 16
        %s1418 = scalar_lea.vmem [#allocation14], %s1417
        // Predicated region
        $region93: #{tpu_custom_call.1} parent=63 // pred_check
          %p1419 = pneg %p297
        $region94: #{tpu_custom_call.1} parent=63 // pred_check_branch
          %1421 = sbr.rel (%p1419) target = $region96
        $region95: #{tpu_custom_call.1} parent=63 // pred_region
          %s1423 = ssub.s32 256, 256
          %1424 = vsyncadd %s1415, %s1423
          %s1425 = smul.addr %s33, 2
          %s1426 = smul.addr %s1425, 128
          %s1427 = scalar_lea.hbm %s11, %s1426
          %s1428 = sshll.u32 %s1418, 4
          %s1429 = int_to_ptr.vmem [resolvable:$true] %s1428
          %1434 = dma.vmem_to_hbm [thread:$0]  %s1429, 256, %s1427, %s1415, 128, 128, 8
        $region96: #{tpu_custom_call.1} parent=63 // pred_fallthru
          _
      $region64: #{tpu_custom_call.1} parent=5 // pred_fallthru
        _
      %p1435 = scmp.le.s32.totalorder 2, %s28
      // Predicated region
      $region97: #{tpu_custom_call.1} parent=5 // pred_check
        %p1436 = pneg %p1435
      $region98: #{tpu_custom_call.1} parent=5 // pred_check_branch
        %1438 = sbr.rel (%p1436) target = $region100
      $region99: #{tpu_custom_call.1} parent=5 // pred_region
        %s1439 = ssub.s32 %s28, 2
        // Predicated region
        $region101: #{tpu_custom_call.1} parent=99 // pred_check
          %p1440 = pneg %p303
        $region102: #{tpu_custom_call.1} parent=99 // pred_check_branch
          %1442 = sbr.rel (%p1440) target = $region104
        $region103: #{tpu_custom_call.1} parent=99 // pred_region
          %s1443 = sand.u32 %s288, 1
          %s1444 = scalar_lea.sflag [#allocation4], %s1443
          %s1445 = sand.u32 %s288, 1
          %s1446 = smul.addr %s1445, 16
          %s1447 = scalar_lea.vmem [#allocation14], %s1446
          %1448 = dma.done %s1444, 256
        $region104: #{tpu_custom_call.1} parent=99 // pred_fallthru
          _
      $region100: #{tpu_custom_call.1} parent=5 // pred_fallthru
        _
    $region6: #{tpu_custom_call.1} parent=1 // loop_footer
      %s32 = sadd.s32 1, %s28
    $region7: #{tpu_custom_call.1} parent=1 // loop_footer_branch
      %27 = sbr.rel target = $region3
    $region8: #{tpu_custom_call.1} parent=1 // loop_exit
      _
    %1449 = vsyncpa [#allocation3], 1
    %s1450 = scalar_lea.sflag [#allocation3], 1
    %1451 = vsyncpa %s1450, 1
    %1452 = vsyncpa [#allocation6], 1
    %s1453 = scalar_lea.sflag [#allocation6], 1
    %1454 = vsyncpa %s1453, 1
    %1455 = vsyncpa [#allocation9], 1
    %1456 = vsyncpa [#allocation12], 1
    %1457 = vsyncpa [#allocation4], 1
    %s1458 = scalar_lea.sflag [#allocation4], 1
    %1459 = vsyncpa %s1458, 1

</llo_original>
